<compile_context>
chip_gen: v6e
topology: v6e:2x2x1
jax: 0.10.0
libtpu: 0.0.40
codegen_flags: <defaults>
</compile_context>

<pallas_src>
import functools

import jax
import jax.numpy as jnp
from jax.experimental import pallas as pl
from jax.experimental.pallas import tpu as pltpu


# ----------------------------------------------------------------------------- config

class Config:
    vocab_size = 128
    max_position = 16
    hidden = 32
    num_heads = 2
    head_dim = 16
    intermediate = 64
    num_layers = 2
    num_classes_topic = 4
    num_classes_sentiment = 3


CFG = Config()


# ----------------------------------------------------------------------------- in-kernel math

_SQRT1_2 = 0.7071067811865476


def _erf_approx(x):
    # Abramowitz & Stegun 7.1.26 polynomial, |abs err| <= 1.5e-7.  Used instead of
    # lax.erf to guarantee a clean Mosaic lowering (only mul/add/abs/exp/div/where).
    a1, a2, a3, a4, a5 = 0.254829592, -0.284496736, 1.421413741, -1.453152027, 1.061405429
    p = 0.3275911
    ax = jnp.abs(x)
    t = 1.0 / (1.0 + p * ax)
    poly = ((((a5 * t + a4) * t + a3) * t + a2) * t + a1) * t
    y = 1.0 - poly * jnp.exp(-ax * ax)
    return jnp.where(x < 0.0, -y, y)


def _gelu_exact(x):
    # erf-based GELU: matches torch.nn.GELU() / standard BERT (not the tanh approximation)
    return 0.5 * x * (1.0 + _erf_approx(x * _SQRT1_2))


# ----------------------------------------------------------------------------- fused encoder kernel

def _encoder_kernel(emb_ref, mask_ref, eg_ref, ebeta_ref,
                    wqkv_ref, bqkv_ref, wo_ref, bo_ref,
                    ln1g_ref, ln1b_ref, w1_ref, b1_ref,
                    w2_ref, b2_ref, ln2g_ref, ln2b_ref,
                    out_ref, *, num_layers, num_heads, head_dim, eps):
    f32 = jnp.float32
    x = emb_ref[0].astype(f32)            # (S, H) embeddings for this batch element
    add_mask = mask_ref[0].astype(f32)    # (1, S) additive mask (0 / -1e9)
    H = num_heads * head_dim
    scale = 1.0 / (head_dim ** 0.5)

    def layer_norm(y, g, b):
        mu = jnp.mean(y, axis=-1, keepdims=True)
        var = jnp.mean(jnp.square(y - mu), axis=-1, keepdims=True)
        return (y - mu) * jax.lax.rsqrt(var + eps) * g + b

    # Embedding LayerNorm — no dummy zeros residual.
    h = layer_norm(x, eg_ref[...], ebeta_ref[...])                         # (S, H)

    # Static unroll over layers: all per-layer weights stay VMEM-resident.
    for l in range(num_layers):
        # --- fused QKV projection: one [H, 3H] matmul ---
        qkv = jnp.dot(h, wqkv_ref[l], preferred_element_type=f32) + bqkv_ref[l]   # (S, 3H)
        wo = wo_ref[l]                                                            # (H, H)

        # --- multi-head attention, all heads in this single grid step ---
        attn = None
        for hd in range(num_heads):
            lo = hd * head_dim
            hi = lo + head_dim
            q = qkv[:, lo:hi] * scale                    # (S, Dh)
            k = qkv[:, H + lo:H + hi]                    # (S, Dh)
            v = qkv[:, 2 * H + lo:2 * H + hi]            # (S, Dh)
            # scores: q @ k^T without explicit transpose (contract last dims)
            s = jax.lax.dot_general(q, k, (((1,), (1,)), ((), ())),
                                    preferred_element_type=f32) + add_mask        # (S, S)
            s = s - jnp.max(s, axis=-1, keepdims=True)
            p = jnp.exp(s)
            p = p * pl.reciprocal(jnp.sum(p, axis=-1, keepdims=True), approx=True)
            ctx = jnp.dot(p, v, preferred_element_type=f32)                       # (S, Dh)
            # fold the output projection per head: sum_h ctx_h @ Wo[rows of head h]
            part = jnp.dot(ctx, wo[lo:hi, :], preferred_element_type=f32)         # (S, H)
            attn = part if attn is None else attn + part
        attn = attn + bo_ref[l]

        # --- add & LayerNorm ---
        h = layer_norm(attn + h, ln1g_ref[l], ln1b_ref[l])

        # --- feed-forward: w1 -> exact GELU -> w2 ---
        ff = jnp.dot(h, w1_ref[l], preferred_element_type=f32) + b1_ref[l]
        ff = _gelu_exact(ff)
        ff = jnp.dot(ff, w2_ref[l], preferred_element_type=f32) + b2_ref[l]
        h = layer_norm(ff + h, ln2g_ref[l], ln2b_ref[l])

    out_ref[0] = h.astype(out_ref.dtype)


def bert_encoder(params, cfg, input_ids, attention_mask):
    """Returns last_hidden_state [B, S, H] from one fused pallas_call."""
    B, S = input_ids.shape
    H, I, L = cfg.hidden, cfg.intermediate, cfg.num_layers

    # Embedding lookup is gather glue — plain JAX.  token_type_ids default to 0
    # (HF BERT default when only input_ids/attention_mask are passed).
    emb = (jnp.take(params["word_emb"], input_ids, axis=0)
           + params["pos_emb"][:S][None, :, :]
           + params["type_emb"][0][None, None, :])                        # [B, S, H]
    add_mask = (1.0 - attention_mask.astype(jnp.float32))[:, None, :] * -1e9   # [B, 1, S]

    kernel = functools.partial(
        _encoder_kernel, num_layers=L, num_heads=cfg.num_heads,
        head_dim=cfg.head_dim, eps=1e-12)

    def full3(shape):
        return pl.BlockSpec(shape, lambda b: (0, 0, 0))

    return pl.pallas_call(
        kernel,
        out_shape=jax.ShapeDtypeStruct((B, S, H), jnp.float32),
        grid=(B,),
        in_specs=[
            pl.BlockSpec((1, S, H), lambda b: (b, 0, 0)),   # embeddings (per batch)
            pl.BlockSpec((1, 1, S), lambda b: (b, 0, 0)),   # additive mask (per batch)
            pl.BlockSpec((1, H), lambda b: (0, 0)),         # emb LN gamma
            pl.BlockSpec((1, H), lambda b: (0, 0)),         # emb LN beta
            full3((L, H, 3 * H)), full3((L, 1, 3 * H)),     # fused QKV weight / bias
            full3((L, H, H)), full3((L, 1, H)),             # output proj weight / bias
            full3((L, 1, H)), full3((L, 1, H)),             # LN1 gamma / beta
            full3((L, H, I)), full3((L, 1, I)),             # FFN w1 / b1
            full3((L, I, H)), full3((L, 1, H)),             # FFN w2 / b2
            full3((L, 1, H)), full3((L, 1, H)),             # LN2 gamma / beta
        ],
        out_specs=pl.BlockSpec((1, S, H), lambda b: (b, 0, 0)),
        compiler_params=pltpu.CompilerParams(
            dimension_semantics=("parallel",)),             # batch shards across v7x's 2 TCs
    )(emb, add_mask, params["emb_ln_g"], params["emb_ln_b"],
      params["wqkv"], params["bqkv"], params["wo"], params["bo"],
      params["ln1_g"], params["ln1_b"], params["w1"], params["b1"],
      params["w2"], params["b2"], params["ln2_g"], params["ln2_b"])


# ----------------------------------------------------------------------------- model / params

def init_params(key, cfg):
    scale = 0.02
    keys = iter(jax.random.split(key, 128))
    H, I, L = cfg.hidden, cfg.intermediate, cfg.num_layers

    def normal(shape):
        return scale * jax.random.normal(next(keys), shape, dtype=jnp.float32)

    p = {}
    p["word_emb"] = normal((cfg.vocab_size, H))
    p["pos_emb"] = normal((cfg.max_position, H))
    p["type_emb"] = normal((2, H))
    p["emb_ln_g"] = jnp.ones((1, H), jnp.float32)
    p["emb_ln_b"] = jnp.zeros((1, H), jnp.float32)

    # Per-layer weights stacked on a leading layer axis; Wq|Wk|Wv fused into [H, 3H].
    # (Stored as [in, out], i.e. already transposed vs torch nn.Linear.)
    p["wqkv"] = jnp.stack([
        jnp.concatenate([normal((H, H)), normal((H, H)), normal((H, H))], axis=1)
        for _ in range(L)])                                   # [L, H, 3H]
    p["bqkv"] = jnp.zeros((L, 1, 3 * H), jnp.float32)
    p["wo"] = jnp.stack([normal((H, H)) for _ in range(L)])   # [L, H, H]
    p["bo"] = jnp.zeros((L, 1, H), jnp.float32)
    p["ln1_g"] = jnp.ones((L, 1, H), jnp.float32)
    p["ln1_b"] = jnp.zeros((L, 1, H), jnp.float32)
    p["w1"] = jnp.stack([normal((H, I)) for _ in range(L)])   # [L, H, I]
    p["b1"] = jnp.zeros((L, 1, I), jnp.float32)
    p["w2"] = jnp.stack([normal((I, H)) for _ in range(L)])   # [L, I, H]
    p["b2"] = jnp.zeros((L, 1, H), jnp.float32)
    p["ln2_g"] = jnp.ones((L, 1, H), jnp.float32)
    p["ln2_b"] = jnp.zeros((L, 1, H), jnp.float32)

    # classifier heads (tiny: handled by plain XLA dots in the jitted wrapper)
    p["w_topic"] = normal((H, cfg.num_classes_topic))
    p["b_topic"] = jnp.zeros((cfg.num_classes_topic,), jnp.float32)
    p["w_sent"] = normal((H, cfg.num_classes_sentiment))
    p["b_sent"] = jnp.zeros((cfg.num_classes_sentiment,), jnp.float32)
    return p


@jax.jit
def forward_both(params, input_ids, attention_mask):
    """Run the encoder ONCE; apply both task heads to the shared pooled output."""
    last_hidden = bert_encoder(params, CFG, input_ids, attention_mask)   # [B, S, H]
    pooled = last_hidden[:, 0]                     # CLS token; Dropout(0.1) is identity (eval)
    topic = pooled @ params["w_topic"] + params["b_topic"]
    sent = pooled @ params["w_sent"] + params["b_sent"]
    return topic, sent


def multitask_bert_forward(params, input_ids, attention_mask, task=None):
    # Reference semantics: 'class' in task -> topic head; 'sent' in task -> sentiment head.
    # task=None returns None (instead of the reference's TypeError).
    if task is None:
        return None
    topic, sent = forward_both(params, input_ids, attention_mask)
    if "class" in task:
        return topic
    elif "sent" in task:
        return sent
    return None


# ----------------------------------------------------------------------------- main

if __name__ == "__main__":
    key = jax.random.PRNGKey(0)
    k_param, k_ids = jax.random.split(key)
    params = init_params(k_param, CFG)

    B, S = 2, 8
    input_ids = jax.random.randint(k_ids, (B, S), 0, CFG.vocab_size, dtype=jnp.int32)
    attention_mask = jnp.array([[1, 1, 1, 1, 1, 1, 1, 1],
                                [1, 1, 1, 1, 1, 1, 0, 0]], dtype=jnp.int32)

    # Single jitted forward: the fused encoder kernel runs once; both heads share it.
    topic_logits, sent_logits = forward_both(params, input_ids, attention_mask)
    jax.block_until_ready((topic_logits, sent_logits))

    assert topic_logits.shape == (B, CFG.num_classes_topic)
    assert sent_logits.shape == (B, CFG.num_classes_sentiment)
    assert jnp.all(jnp.isfinite(topic_logits)) and jnp.all(jnp.isfinite(sent_logits))

    # Task-selection API matches the shared-encoder results; task=None is graceful.
    assert multitask_bert_forward(params, input_ids, attention_mask, task=None) is None
    t = multitask_bert_forward(params, input_ids, attention_mask, task="classification")
    s = multitask_bert_forward(params, input_ids, attention_mask, task="sentiment")
    jax.block_until_ready((t, s))
    assert jnp.allclose(t, topic_logits) and jnp.allclose(s, sent_logits)

    print("KERNEL_OK")
</pallas_src>

<mosaic_0001>
module attributes {stable_mosaic.version = 11 : i64} {
  func.func @_encoder_kernel(%arg0: i32, %arg1: memref<1x8x32xf32, #tpu.memory_space<vmem>>, %arg2: memref<1x1x8xf32, #tpu.memory_space<vmem>>, %arg3: memref<1x32xf32, #tpu.memory_space<vmem>>, %arg4: memref<1x32xf32, #tpu.memory_space<vmem>>, %arg5: memref<2x32x96xf32, #tpu.memory_space<vmem>>, %arg6: memref<2x1x96xf32, #tpu.memory_space<vmem>>, %arg7: memref<2x32x32xf32, #tpu.memory_space<vmem>>, %arg8: memref<2x1x32xf32, #tpu.memory_space<vmem>>, %arg9: memref<2x1x32xf32, #tpu.memory_space<vmem>>, %arg10: memref<2x1x32xf32, #tpu.memory_space<vmem>>, %arg11: memref<2x32x64xf32, #tpu.memory_space<vmem>>, %arg12: memref<2x1x64xf32, #tpu.memory_space<vmem>>, %arg13: memref<2x64x32xf32, #tpu.memory_space<vmem>>, %arg14: memref<2x1x32xf32, #tpu.memory_space<vmem>>, %arg15: memref<2x1x32xf32, #tpu.memory_space<vmem>>, %arg16: memref<2x1x32xf32, #tpu.memory_space<vmem>>, %arg17: memref<1x8x32xf32, #tpu.memory_space<vmem>>) attributes {dimension_semantics = [#tpu.dimension_semantics<parallel>], iteration_bounds = array<i64: 2>, scalar_prefetch = 0 : i64, scratch_operands = 0 : i64, tpu.core_type = #tpu.core_type<tc>, window_params = [{transform_indices = @transform_0, window_bounds = array<i64: 1, 8, 32>}, {transform_indices = @transform_1, window_bounds = array<i64: 1, 1, 8>}, {pipeline_mode = #tpu.pipeline_mode<synchronous>, transform_indices = @transform_2, window_bounds = array<i64: 1, 32>}, {pipeline_mode = #tpu.pipeline_mode<synchronous>, transform_indices = @transform_3, window_bounds = array<i64: 1, 32>}, {pipeline_mode = #tpu.pipeline_mode<synchronous>, transform_indices = @transform_4, window_bounds = array<i64: 2, 32, 96>}, {pipeline_mode = #tpu.pipeline_mode<synchronous>, transform_indices = @transform_5, window_bounds = array<i64: 2, 1, 96>}, {pipeline_mode = #tpu.pipeline_mode<synchronous>, transform_indices = @transform_6, window_bounds = array<i64: 2, 32, 32>}, {pipeline_mode = #tpu.pipeline_mode<synchronous>, transform_indices = @transform_7, window_bounds = array<i64: 2, 1, 32>}, {pipeline_mode = #tpu.pipeline_mode<synchronous>, transform_indices = @transform_8, window_bounds = array<i64: 2, 1, 32>}, {pipeline_mode = #tpu.pipeline_mode<synchronous>, transform_indices = @transform_9, window_bounds = array<i64: 2, 1, 32>}, {pipeline_mode = #tpu.pipeline_mode<synchronous>, transform_indices = @transform_10, window_bounds = array<i64: 2, 32, 64>}, {pipeline_mode = #tpu.pipeline_mode<synchronous>, transform_indices = @transform_11, window_bounds = array<i64: 2, 1, 64>}, {pipeline_mode = #tpu.pipeline_mode<synchronous>, transform_indices = @transform_12, window_bounds = array<i64: 2, 64, 32>}, {pipeline_mode = #tpu.pipeline_mode<synchronous>, transform_indices = @transform_13, window_bounds = array<i64: 2, 1, 32>}, {pipeline_mode = #tpu.pipeline_mode<synchronous>, transform_indices = @transform_14, window_bounds = array<i64: 2, 1, 32>}, {pipeline_mode = #tpu.pipeline_mode<synchronous>, transform_indices = @transform_15, window_bounds = array<i64: 2, 1, 32>}, {transform_indices = @transform_16, window_bounds = array<i64: 1, 8, 32>}]} {
    %c0 = arith.constant 0 : index
    %c0_0 = arith.constant 0 : index
    %c0_1 = arith.constant 0 : index
    %0 = vector.load %arg1[%c0, %c0_0, %c0_1] : memref<1x8x32xf32, #tpu.memory_space<vmem>>, vector<1x8x32xf32>
    %1 = vector.shape_cast %0 : vector<1x8x32xf32> to vector<8x32xf32>
    %c0_2 = arith.constant 0 : index
    %c0_3 = arith.constant 0 : index
    %c0_4 = arith.constant 0 : index
    %2 = vector.load %arg2[%c0_2, %c0_3, %c0_4] : memref<1x1x8xf32, #tpu.memory_space<vmem>>, vector<1x1x8xf32>
    %3 = vector.shape_cast %2 : vector<1x1x8xf32> to vector<1x8xf32>
    %c0_5 = arith.constant 0 : index
    %c0_6 = arith.constant 0 : index
    %4 = vector.load %arg3[%c0_5, %c0_6] : memref<1x32xf32, #tpu.memory_space<vmem>>, vector<1x32xf32>
    %c0_7 = arith.constant 0 : index
    %c0_8 = arith.constant 0 : index
    %5 = vector.load %arg4[%c0_7, %c0_8] : memref<1x32xf32, #tpu.memory_space<vmem>>, vector<1x32xf32>
    %cst = arith.constant dense<0.000000e+00> : vector<8xf32>
    %6 = vector.multi_reduction <add>, %1, %cst [1] : vector<8x32xf32> to vector<8xf32>
    %7 = vector.shape_cast %6 : vector<8xf32> to vector<8x1xf32>
    %cst_9 = arith.constant 3.200000e+01 : f32
    %8 = vector.broadcast %cst_9 : f32 to vector<8x1xf32>
    %9 = arith.divf %7, %8 : vector<8x1xf32>
    %10 = vector.broadcast %9 : vector<8x1xf32> to vector<8x32xf32>
    %11 = arith.subf %1, %10 : vector<8x32xf32>
    %12 = arith.mulf %11, %11 : vector<8x32xf32>
    %cst_10 = arith.constant dense<0.000000e+00> : vector<8xf32>
    %13 = vector.multi_reduction <add>, %12, %cst_10 [1] : vector<8x32xf32> to vector<8xf32>
    %14 = vector.shape_cast %13 : vector<8xf32> to vector<8x1xf32>
    %cst_11 = arith.constant 3.200000e+01 : f32
    %15 = vector.broadcast %cst_11 : f32 to vector<8x1xf32>
    %16 = arith.divf %14, %15 : vector<8x1xf32>
    %17 = vector.broadcast %9 : vector<8x1xf32> to vector<8x32xf32>
    %18 = arith.subf %1, %17 : vector<8x32xf32>
    %cst_12 = arith.constant 9.99999996E-13 : f32
    %19 = vector.broadcast %cst_12 : f32 to vector<8x1xf32>
    %20 = arith.addf %16, %19 : vector<8x1xf32>
    %21 = math.rsqrt %20 : vector<8x1xf32>
    %22 = vector.broadcast %21 : vector<8x1xf32> to vector<8x32xf32>
    %23 = arith.mulf %18, %22 : vector<8x32xf32>
    %24 = vector.broadcast %4 : vector<1x32xf32> to vector<8x32xf32>
    %25 = arith.mulf %23, %24 : vector<8x32xf32>
    %26 = vector.broadcast %5 : vector<1x32xf32> to vector<8x32xf32>
    %27 = arith.addf %25, %26 : vector<8x32xf32>
    %c0_13 = arith.constant 0 : index
    %c0_14 = arith.constant 0 : index
    %c0_15 = arith.constant 0 : index
    %28 = vector.load %arg5[%c0_13, %c0_14, %c0_15] : memref<2x32x96xf32, #tpu.memory_space<vmem>>, vector<1x32x96xf32>
    %29 = vector.shape_cast %28 : vector<1x32x96xf32> to vector<32x96xf32>
    %cst_16 = arith.constant dense<0.000000e+00> : vector<8x96xf32>
    %30 = tpu.matmul %27, %29, %cst_16 {dimension_numbers = #tpu.dot_dimension_numbers<[1], [0], [0], [1], [0, 0, 1, 1], [], []>} : vector<8x32xf32>, vector<32x96xf32>, vector<8x96xf32> -> vector<8x96xf32>
    %c0_17 = arith.constant 0 : index
    %c0_18 = arith.constant 0 : index
    %c0_19 = arith.constant 0 : index
    %31 = vector.load %arg6[%c0_17, %c0_18, %c0_19] : memref<2x1x96xf32, #tpu.memory_space<vmem>>, vector<1x1x96xf32>
    %32 = vector.shape_cast %31 : vector<1x1x96xf32> to vector<1x96xf32>
    %33 = vector.broadcast %32 : vector<1x96xf32> to vector<8x96xf32>
    %34 = arith.addf %30, %33 : vector<8x96xf32>
    %c0_20 = arith.constant 0 : index
    %c0_21 = arith.constant 0 : index
    %c0_22 = arith.constant 0 : index
    %35 = vector.load %arg7[%c0_20, %c0_21, %c0_22] : memref<2x32x32xf32, #tpu.memory_space<vmem>>, vector<1x32x32xf32>
    %36 = vector.shape_cast %35 : vector<1x32x32xf32> to vector<32x32xf32>
    %37 = vector.extract_strided_slice %34 {offsets = [0, 0], sizes = [8, 16], strides = [1, 1]} : vector<8x96xf32> to vector<8x16xf32>
    %cst_23 = arith.constant 2.500000e-01 : f32
    %38 = vector.broadcast %cst_23 : f32 to vector<8x16xf32>
    %39 = arith.mulf %37, %38 : vector<8x16xf32>
    %40 = vector.extract_strided_slice %34 {offsets = [0, 32], sizes = [8, 16], strides = [1, 1]} : vector<8x96xf32> to vector<8x16xf32>
    %41 = vector.extract_strided_slice %34 {offsets = [0, 64], sizes = [8, 16], strides = [1, 1]} : vector<8x96xf32> to vector<8x16xf32>
    %cst_24 = arith.constant dense<0.000000e+00> : vector<8x8xf32>
    %42 = tpu.matmul %39, %40, %cst_24 {dimension_numbers = #tpu.dot_dimension_numbers<[1], [1], [0], [0], [0, 0, 1, 0], [], []>} : vector<8x16xf32>, vector<8x16xf32>, vector<8x8xf32> -> vector<8x8xf32>
    %43 = vector.broadcast %3 : vector<1x8xf32> to vector<8x8xf32>
    %44 = arith.addf %42, %43 : vector<8x8xf32>
    %cst_25 = arith.constant dense<0xFF800000> : vector<8xf32>
    %45 = vector.multi_reduction <maximumf>, %44, %cst_25 [1] : vector<8x8xf32> to vector<8xf32>
    %46 = vector.shape_cast %45 : vector<8xf32> to vector<8x1xf32>
    %47 = vector.broadcast %46 : vector<8x1xf32> to vector<8x8xf32>
    %48 = arith.subf %44, %47 : vector<8x8xf32>
    %49 = math.exp %48 : vector<8x8xf32>
    %cst_26 = arith.constant dense<0.000000e+00> : vector<8xf32>
    %50 = vector.multi_reduction <add>, %49, %cst_26 [1] : vector<8x8xf32> to vector<8xf32>
    %51 = vector.shape_cast %50 : vector<8xf32> to vector<8x1xf32>
    %52 = tpu.reciprocal %51 {approx = true} : vector<8x1xf32> -> vector<8x1xf32>
    %53 = vector.broadcast %52 : vector<8x1xf32> to vector<8x8xf32>
    %54 = arith.mulf %49, %53 : vector<8x8xf32>
    %cst_27 = arith.constant dense<0.000000e+00> : vector<8x16xf32>
    %55 = tpu.matmul %54, %41, %cst_27 {dimension_numbers = #tpu.dot_dimension_numbers<[1], [0], [0], [1], [0, 0, 1, 1], [], []>} : vector<8x8xf32>, vector<8x16xf32>, vector<8x16xf32> -> vector<8x16xf32>
    %56 = vector.extract_strided_slice %36 {offsets = [0, 0], sizes = [16, 32], strides = [1, 1]} : vector<32x32xf32> to vector<16x32xf32>
    %cst_28 = arith.constant dense<0.000000e+00> : vector<8x32xf32>
    %57 = tpu.matmul %55, %56, %cst_28 {dimension_numbers = #tpu.dot_dimension_numbers<[1], [0], [0], [1], [0, 0, 1, 1], [], []>} : vector<8x16xf32>, vector<16x32xf32>, vector<8x32xf32> -> vector<8x32xf32>
    %58 = vector.extract_strided_slice %34 {offsets = [0, 16], sizes = [8, 16], strides = [1, 1]} : vector<8x96xf32> to vector<8x16xf32>
    %cst_29 = arith.constant 2.500000e-01 : f32
    %59 = vector.broadcast %cst_29 : f32 to vector<8x16xf32>
    %60 = arith.mulf %58, %59 : vector<8x16xf32>
    %61 = vector.extract_strided_slice %34 {offsets = [0, 48], sizes = [8, 16], strides = [1, 1]} : vector<8x96xf32> to vector<8x16xf32>
    %62 = vector.extract_strided_slice %34 {offsets = [0, 80], sizes = [8, 16], strides = [1, 1]} : vector<8x96xf32> to vector<8x16xf32>
    %cst_30 = arith.constant dense<0.000000e+00> : vector<8x8xf32>
    %63 = tpu.matmul %60, %61, %cst_30 {dimension_numbers = #tpu.dot_dimension_numbers<[1], [1], [0], [0], [0, 0, 1, 0], [], []>} : vector<8x16xf32>, vector<8x16xf32>, vector<8x8xf32> -> vector<8x8xf32>
    %64 = vector.broadcast %3 : vector<1x8xf32> to vector<8x8xf32>
    %65 = arith.addf %63, %64 : vector<8x8xf32>
    %cst_31 = arith.constant dense<0xFF800000> : vector<8xf32>
    %66 = vector.multi_reduction <maximumf>, %65, %cst_31 [1] : vector<8x8xf32> to vector<8xf32>
    %67 = vector.shape_cast %66 : vector<8xf32> to vector<8x1xf32>
    %68 = vector.broadcast %67 : vector<8x1xf32> to vector<8x8xf32>
    %69 = arith.subf %65, %68 : vector<8x8xf32>
    %70 = math.exp %69 : vector<8x8xf32>
    %cst_32 = arith.constant dense<0.000000e+00> : vector<8xf32>
    %71 = vector.multi_reduction <add>, %70, %cst_32 [1] : vector<8x8xf32> to vector<8xf32>
    %72 = vector.shape_cast %71 : vector<8xf32> to vector<8x1xf32>
    %73 = tpu.reciprocal %72 {approx = true} : vector<8x1xf32> -> vector<8x1xf32>
    %74 = vector.broadcast %73 : vector<8x1xf32> to vector<8x8xf32>
    %75 = arith.mulf %70, %74 : vector<8x8xf32>
    %cst_33 = arith.constant dense<0.000000e+00> : vector<8x16xf32>
    %76 = tpu.matmul %75, %62, %cst_33 {dimension_numbers = #tpu.dot_dimension_numbers<[1], [0], [0], [1], [0, 0, 1, 1], [], []>} : vector<8x8xf32>, vector<8x16xf32>, vector<8x16xf32> -> vector<8x16xf32>
    %77 = vector.extract_strided_slice %36 {offsets = [16, 0], sizes = [16, 32], strides = [1, 1]} : vector<32x32xf32> to vector<16x32xf32>
    %cst_34 = arith.constant dense<0.000000e+00> : vector<8x32xf32>
    %78 = tpu.matmul %76, %77, %cst_34 {dimension_numbers = #tpu.dot_dimension_numbers<[1], [0], [0], [1], [0, 0, 1, 1], [], []>} : vector<8x16xf32>, vector<16x32xf32>, vector<8x32xf32> -> vector<8x32xf32>
    %79 = arith.addf %57, %78 : vector<8x32xf32>
    %c0_35 = arith.constant 0 : index
    %c0_36 = arith.constant 0 : index
    %c0_37 = arith.constant 0 : index
    %80 = vector.load %arg8[%c0_35, %c0_36, %c0_37] : memref<2x1x32xf32, #tpu.memory_space<vmem>>, vector<1x1x32xf32>
    %81 = vector.shape_cast %80 : vector<1x1x32xf32> to vector<1x32xf32>
    %82 = vector.broadcast %81 : vector<1x32xf32> to vector<8x32xf32>
    %83 = arith.addf %79, %82 : vector<8x32xf32>
    %84 = arith.addf %83, %27 : vector<8x32xf32>
    %c0_38 = arith.constant 0 : index
    %c0_39 = arith.constant 0 : index
    %c0_40 = arith.constant 0 : index
    %85 = vector.load %arg9[%c0_38, %c0_39, %c0_40] : memref<2x1x32xf32, #tpu.memory_space<vmem>>, vector<1x1x32xf32>
    %86 = vector.shape_cast %85 : vector<1x1x32xf32> to vector<1x32xf32>
    %c0_41 = arith.constant 0 : index
    %c0_42 = arith.constant 0 : index
    %c0_43 = arith.constant 0 : index
    %87 = vector.load %arg10[%c0_41, %c0_42, %c0_43] : memref<2x1x32xf32, #tpu.memory_space<vmem>>, vector<1x1x32xf32>
    %88 = vector.shape_cast %87 : vector<1x1x32xf32> to vector<1x32xf32>
    %cst_44 = arith.constant dense<0.000000e+00> : vector<8xf32>
    %89 = vector.multi_reduction <add>, %84, %cst_44 [1] : vector<8x32xf32> to vector<8xf32>
    %90 = vector.shape_cast %89 : vector<8xf32> to vector<8x1xf32>
    %cst_45 = arith.constant 3.200000e+01 : f32
    %91 = vector.broadcast %cst_45 : f32 to vector<8x1xf32>
    %92 = arith.divf %90, %91 : vector<8x1xf32>
    %93 = vector.broadcast %92 : vector<8x1xf32> to vector<8x32xf32>
    %94 = arith.subf %84, %93 : vector<8x32xf32>
    %95 = arith.mulf %94, %94 : vector<8x32xf32>
    %cst_46 = arith.constant dense<0.000000e+00> : vector<8xf32>
    %96 = vector.multi_reduction <add>, %95, %cst_46 [1] : vector<8x32xf32> to vector<8xf32>
    %97 = vector.shape_cast %96 : vector<8xf32> to vector<8x1xf32>
    %cst_47 = arith.constant 3.200000e+01 : f32
    %98 = vector.broadcast %cst_47 : f32 to vector<8x1xf32>
    %99 = arith.divf %97, %98 : vector<8x1xf32>
    %100 = vector.broadcast %92 : vector<8x1xf32> to vector<8x32xf32>
    %101 = arith.subf %84, %100 : vector<8x32xf32>
    %cst_48 = arith.constant 9.99999996E-13 : f32
    %102 = vector.broadcast %cst_48 : f32 to vector<8x1xf32>
    %103 = arith.addf %99, %102 : vector<8x1xf32>
    %104 = math.rsqrt %103 : vector<8x1xf32>
    %105 = vector.broadcast %104 : vector<8x1xf32> to vector<8x32xf32>
    %106 = arith.mulf %101, %105 : vector<8x32xf32>
    %107 = vector.broadcast %86 : vector<1x32xf32> to vector<8x32xf32>
    %108 = arith.mulf %106, %107 : vector<8x32xf32>
    %109 = vector.broadcast %88 : vector<1x32xf32> to vector<8x32xf32>
    %110 = arith.addf %108, %109 : vector<8x32xf32>
    %c0_49 = arith.constant 0 : index
    %c0_50 = arith.constant 0 : index
    %c0_51 = arith.constant 0 : index
    %111 = vector.load %arg11[%c0_49, %c0_50, %c0_51] : memref<2x32x64xf32, #tpu.memory_space<vmem>>, vector<1x32x64xf32>
    %112 = vector.shape_cast %111 : vector<1x32x64xf32> to vector<32x64xf32>
    %cst_52 = arith.constant dense<0.000000e+00> : vector<8x64xf32>
    %113 = tpu.matmul %110, %112, %cst_52 {dimension_numbers = #tpu.dot_dimension_numbers<[1], [0], [0], [1], [0, 0, 1, 1], [], []>} : vector<8x32xf32>, vector<32x64xf32>, vector<8x64xf32> -> vector<8x64xf32>
    %c0_53 = arith.constant 0 : index
    %c0_54 = arith.constant 0 : index
    %c0_55 = arith.constant 0 : index
    %114 = vector.load %arg12[%c0_53, %c0_54, %c0_55] : memref<2x1x64xf32, #tpu.memory_space<vmem>>, vector<1x1x64xf32>
    %115 = vector.shape_cast %114 : vector<1x1x64xf32> to vector<1x64xf32>
    %116 = vector.broadcast %115 : vector<1x64xf32> to vector<8x64xf32>
    %117 = arith.addf %113, %116 : vector<8x64xf32>
    %cst_56 = arith.constant 5.000000e-01 : f32
    %118 = vector.broadcast %cst_56 : f32 to vector<8x64xf32>
    %119 = arith.mulf %118, %117 : vector<8x64xf32>
    %cst_57 = arith.constant 0.707106769 : f32
    %120 = vector.broadcast %cst_57 : f32 to vector<8x64xf32>
    %121 = arith.mulf %117, %120 : vector<8x64xf32>
    %122 = math.absf %121 : vector<8x64xf32>
    %cst_58 = arith.constant 0.327591091 : f32
    %123 = vector.broadcast %cst_58 : f32 to vector<8x64xf32>
    %124 = arith.mulf %123, %122 : vector<8x64xf32>
    %cst_59 = arith.constant 1.000000e+00 : f32
    %125 = vector.broadcast %cst_59 : f32 to vector<8x64xf32>
    %126 = arith.addf %125, %124 : vector<8x64xf32>
    %cst_60 = arith.constant 1.000000e+00 : f32
    %127 = vector.broadcast %cst_60 : f32 to vector<8x64xf32>
    %128 = arith.divf %127, %126 : vector<8x64xf32>
    %cst_61 = arith.constant 1.06140542 : f32
    %129 = vector.broadcast %cst_61 : f32 to vector<8x64xf32>
    %130 = arith.mulf %129, %128 : vector<8x64xf32>
    %cst_62 = arith.constant -1.45315206 : f32
    %131 = vector.broadcast %cst_62 : f32 to vector<8x64xf32>
    %132 = arith.addf %130, %131 : vector<8x64xf32>
    %133 = arith.mulf %132, %128 : vector<8x64xf32>
    %cst_63 = arith.constant 1.42141378 : f32
    %134 = vector.broadcast %cst_63 : f32 to vector<8x64xf32>
    %135 = arith.addf %133, %134 : vector<8x64xf32>
    %136 = arith.mulf %135, %128 : vector<8x64xf32>
    %cst_64 = arith.constant -0.284496725 : f32
    %137 = vector.broadcast %cst_64 : f32 to vector<8x64xf32>
    %138 = arith.addf %136, %137 : vector<8x64xf32>
    %139 = arith.mulf %138, %128 : vector<8x64xf32>
    %cst_65 = arith.constant 0.254829586 : f32
    %140 = vector.broadcast %cst_65 : f32 to vector<8x64xf32>
    %141 = arith.addf %139, %140 : vector<8x64xf32>
    %142 = arith.mulf %141, %128 : vector<8x64xf32>
    %cst_66 = arith.constant 0.000000e+00 : f32
    %143 = vector.broadcast %cst_66 : f32 to vector<8x64xf32>
    %144 = arith.subf %143, %122 : vector<8x64xf32>
    %145 = arith.mulf %144, %122 : vector<8x64xf32>
    %146 = math.exp %145 : vector<8x64xf32>
    %147 = arith.mulf %142, %146 : vector<8x64xf32>
    %cst_67 = arith.constant 1.000000e+00 : f32
    %148 = vector.broadcast %cst_67 : f32 to vector<8x64xf32>
    %149 = arith.subf %148, %147 : vector<8x64xf32>
    %cst_68 = arith.constant 0.000000e+00 : f32
    %150 = vector.broadcast %cst_68 : f32 to vector<8x64xf32>
    %151 = arith.cmpf olt, %121, %150 : vector<8x64xf32>
    %cst_69 = arith.constant 0.000000e+00 : f32
    %152 = vector.broadcast %cst_69 : f32 to vector<8x64xf32>
    %153 = arith.subf %152, %149 : vector<8x64xf32>
    %154 = arith.select %151, %153, %149 : vector<8x64xi1>, vector<8x64xf32>
    %cst_70 = arith.constant 1.000000e+00 : f32
    %155 = vector.broadcast %cst_70 : f32 to vector<8x64xf32>
    %156 = arith.addf %155, %154 : vector<8x64xf32>
    %157 = arith.mulf %119, %156 : vector<8x64xf32>
    %c0_71 = arith.constant 0 : index
    %c0_72 = arith.constant 0 : index
    %c0_73 = arith.constant 0 : index
    %158 = vector.load %arg13[%c0_71, %c0_72, %c0_73] : memref<2x64x32xf32, #tpu.memory_space<vmem>>, vector<1x64x32xf32>
    %159 = vector.shape_cast %158 : vector<1x64x32xf32> to vector<64x32xf32>
    %cst_74 = arith.constant dense<0.000000e+00> : vector<8x32xf32>
    %160 = tpu.matmul %157, %159, %cst_74 {dimension_numbers = #tpu.dot_dimension_numbers<[1], [0], [0], [1], [0, 0, 1, 1], [], []>} : vector<8x64xf32>, vector<64x32xf32>, vector<8x32xf32> -> vector<8x32xf32>
    %c0_75 = arith.constant 0 : index
    %c0_76 = arith.constant 0 : index
    %c0_77 = arith.constant 0 : index
    %161 = vector.load %arg14[%c0_75, %c0_76, %c0_77] : memref<2x1x32xf32, #tpu.memory_space<vmem>>, vector<1x1x32xf32>
    %162 = vector.shape_cast %161 : vector<1x1x32xf32> to vector<1x32xf32>
    %163 = vector.broadcast %162 : vector<1x32xf32> to vector<8x32xf32>
    %164 = arith.addf %160, %163 : vector<8x32xf32>
    %165 = arith.addf %164, %110 : vector<8x32xf32>
    %c0_78 = arith.constant 0 : index
    %c0_79 = arith.constant 0 : index
    %c0_80 = arith.constant 0 : index
    %166 = vector.load %arg15[%c0_78, %c0_79, %c0_80] : memref<2x1x32xf32, #tpu.memory_space<vmem>>, vector<1x1x32xf32>
    %167 = vector.shape_cast %166 : vector<1x1x32xf32> to vector<1x32xf32>
    %c0_81 = arith.constant 0 : index
    %c0_82 = arith.constant 0 : index
    %c0_83 = arith.constant 0 : index
    %168 = vector.load %arg16[%c0_81, %c0_82, %c0_83] : memref<2x1x32xf32, #tpu.memory_space<vmem>>, vector<1x1x32xf32>
    %169 = vector.shape_cast %168 : vector<1x1x32xf32> to vector<1x32xf32>
    %cst_84 = arith.constant dense<0.000000e+00> : vector<8xf32>
    %170 = vector.multi_reduction <add>, %165, %cst_84 [1] : vector<8x32xf32> to vector<8xf32>
    %171 = vector.shape_cast %170 : vector<8xf32> to vector<8x1xf32>
    %cst_85 = arith.constant 3.200000e+01 : f32
    %172 = vector.broadcast %cst_85 : f32 to vector<8x1xf32>
    %173 = arith.divf %171, %172 : vector<8x1xf32>
    %174 = vector.broadcast %173 : vector<8x1xf32> to vector<8x32xf32>
    %175 = arith.subf %165, %174 : vector<8x32xf32>
    %176 = arith.mulf %175, %175 : vector<8x32xf32>
    %cst_86 = arith.constant dense<0.000000e+00> : vector<8xf32>
    %177 = vector.multi_reduction <add>, %176, %cst_86 [1] : vector<8x32xf32> to vector<8xf32>
    %178 = vector.shape_cast %177 : vector<8xf32> to vector<8x1xf32>
    %cst_87 = arith.constant 3.200000e+01 : f32
    %179 = vector.broadcast %cst_87 : f32 to vector<8x1xf32>
    %180 = arith.divf %178, %179 : vector<8x1xf32>
    %181 = vector.broadcast %173 : vector<8x1xf32> to vector<8x32xf32>
    %182 = arith.subf %165, %181 : vector<8x32xf32>
    %cst_88 = arith.constant 9.99999996E-13 : f32
    %183 = vector.broadcast %cst_88 : f32 to vector<8x1xf32>
    %184 = arith.addf %180, %183 : vector<8x1xf32>
    %185 = math.rsqrt %184 : vector<8x1xf32>
    %186 = vector.broadcast %185 : vector<8x1xf32> to vector<8x32xf32>
    %187 = arith.mulf %182, %186 : vector<8x32xf32>
    %188 = vector.broadcast %167 : vector<1x32xf32> to vector<8x32xf32>
    %189 = arith.mulf %187, %188 : vector<8x32xf32>
    %190 = vector.broadcast %169 : vector<1x32xf32> to vector<8x32xf32>
    %191 = arith.addf %189, %190 : vector<8x32xf32>
    %c1 = arith.constant 1 : index
    %c0_89 = arith.constant 0 : index
    %c0_90 = arith.constant 0 : index
    %192 = vector.load %arg5[%c1, %c0_89, %c0_90] : memref<2x32x96xf32, #tpu.memory_space<vmem>>, vector<1x32x96xf32>
    %193 = vector.shape_cast %192 : vector<1x32x96xf32> to vector<32x96xf32>
    %cst_91 = arith.constant dense<0.000000e+00> : vector<8x96xf32>
    %194 = tpu.matmul %191, %193, %cst_91 {dimension_numbers = #tpu.dot_dimension_numbers<[1], [0], [0], [1], [0, 0, 1, 1], [], []>} : vector<8x32xf32>, vector<32x96xf32>, vector<8x96xf32> -> vector<8x96xf32>
    %c1_92 = arith.constant 1 : index
    %c0_93 = arith.constant 0 : index
    %c0_94 = arith.constant 0 : index
    %195 = vector.load %arg6[%c1_92, %c0_93, %c0_94] : memref<2x1x96xf32, #tpu.memory_space<vmem>>, vector<1x1x96xf32>
    %196 = vector.shape_cast %195 : vector<1x1x96xf32> to vector<1x96xf32>
    %197 = vector.broadcast %196 : vector<1x96xf32> to vector<8x96xf32>
    %198 = arith.addf %194, %197 : vector<8x96xf32>
    %c1_95 = arith.constant 1 : index
    %c0_96 = arith.constant 0 : index
    %c0_97 = arith.constant 0 : index
    %199 = vector.load %arg7[%c1_95, %c0_96, %c0_97] : memref<2x32x32xf32, #tpu.memory_space<vmem>>, vector<1x32x32xf32>
    %200 = vector.shape_cast %199 : vector<1x32x32xf32> to vector<32x32xf32>
    %201 = vector.extract_strided_slice %198 {offsets = [0, 0], sizes = [8, 16], strides = [1, 1]} : vector<8x96xf32> to vector<8x16xf32>
    %cst_98 = arith.constant 2.500000e-01 : f32
    %202 = vector.broadcast %cst_98 : f32 to vector<8x16xf32>
    %203 = arith.mulf %201, %202 : vector<8x16xf32>
    %204 = vector.extract_strided_slice %198 {offsets = [0, 32], sizes = [8, 16], strides = [1, 1]} : vector<8x96xf32> to vector<8x16xf32>
    %205 = vector.extract_strided_slice %198 {offsets = [0, 64], sizes = [8, 16], strides = [1, 1]} : vector<8x96xf32> to vector<8x16xf32>
    %cst_99 = arith.constant dense<0.000000e+00> : vector<8x8xf32>
    %206 = tpu.matmul %203, %204, %cst_99 {dimension_numbers = #tpu.dot_dimension_numbers<[1], [1], [0], [0], [0, 0, 1, 0], [], []>} : vector<8x16xf32>, vector<8x16xf32>, vector<8x8xf32> -> vector<8x8xf32>
    %207 = vector.broadcast %3 : vector<1x8xf32> to vector<8x8xf32>
    %208 = arith.addf %206, %207 : vector<8x8xf32>
    %cst_100 = arith.constant dense<0xFF800000> : vector<8xf32>
    %209 = vector.multi_reduction <maximumf>, %208, %cst_100 [1] : vector<8x8xf32> to vector<8xf32>
    %210 = vector.shape_cast %209 : vector<8xf32> to vector<8x1xf32>
    %211 = vector.broadcast %210 : vector<8x1xf32> to vector<8x8xf32>
    %212 = arith.subf %208, %211 : vector<8x8xf32>
    %213 = math.exp %212 : vector<8x8xf32>
    %cst_101 = arith.constant dense<0.000000e+00> : vector<8xf32>
    %214 = vector.multi_reduction <add>, %213, %cst_101 [1] : vector<8x8xf32> to vector<8xf32>
    %215 = vector.shape_cast %214 : vector<8xf32> to vector<8x1xf32>
    %216 = tpu.reciprocal %215 {approx = true} : vector<8x1xf32> -> vector<8x1xf32>
    %217 = vector.broadcast %216 : vector<8x1xf32> to vector<8x8xf32>
    %218 = arith.mulf %213, %217 : vector<8x8xf32>
    %cst_102 = arith.constant dense<0.000000e+00> : vector<8x16xf32>
    %219 = tpu.matmul %218, %205, %cst_102 {dimension_numbers = #tpu.dot_dimension_numbers<[1], [0], [0], [1], [0, 0, 1, 1], [], []>} : vector<8x8xf32>, vector<8x16xf32>, vector<8x16xf32> -> vector<8x16xf32>
    %220 = vector.extract_strided_slice %200 {offsets = [0, 0], sizes = [16, 32], strides = [1, 1]} : vector<32x32xf32> to vector<16x32xf32>
    %cst_103 = arith.constant dense<0.000000e+00> : vector<8x32xf32>
    %221 = tpu.matmul %219, %220, %cst_103 {dimension_numbers = #tpu.dot_dimension_numbers<[1], [0], [0], [1], [0, 0, 1, 1], [], []>} : vector<8x16xf32>, vector<16x32xf32>, vector<8x32xf32> -> vector<8x32xf32>
    %222 = vector.extract_strided_slice %198 {offsets = [0, 16], sizes = [8, 16], strides = [1, 1]} : vector<8x96xf32> to vector<8x16xf32>
    %cst_104 = arith.constant 2.500000e-01 : f32
    %223 = vector.broadcast %cst_104 : f32 to vector<8x16xf32>
    %224 = arith.mulf %222, %223 : vector<8x16xf32>
    %225 = vector.extract_strided_slice %198 {offsets = [0, 48], sizes = [8, 16], strides = [1, 1]} : vector<8x96xf32> to vector<8x16xf32>
    %226 = vector.extract_strided_slice %198 {offsets = [0, 80], sizes = [8, 16], strides = [1, 1]} : vector<8x96xf32> to vector<8x16xf32>
    %cst_105 = arith.constant dense<0.000000e+00> : vector<8x8xf32>
    %227 = tpu.matmul %224, %225, %cst_105 {dimension_numbers = #tpu.dot_dimension_numbers<[1], [1], [0], [0], [0, 0, 1, 0], [], []>} : vector<8x16xf32>, vector<8x16xf32>, vector<8x8xf32> -> vector<8x8xf32>
    %228 = vector.broadcast %3 : vector<1x8xf32> to vector<8x8xf32>
    %229 = arith.addf %227, %228 : vector<8x8xf32>
    %cst_106 = arith.constant dense<0xFF800000> : vector<8xf32>
    %230 = vector.multi_reduction <maximumf>, %229, %cst_106 [1] : vector<8x8xf32> to vector<8xf32>
    %231 = vector.shape_cast %230 : vector<8xf32> to vector<8x1xf32>
    %232 = vector.broadcast %231 : vector<8x1xf32> to vector<8x8xf32>
    %233 = arith.subf %229, %232 : vector<8x8xf32>
    %234 = math.exp %233 : vector<8x8xf32>
    %cst_107 = arith.constant dense<0.000000e+00> : vector<8xf32>
    %235 = vector.multi_reduction <add>, %234, %cst_107 [1] : vector<8x8xf32> to vector<8xf32>
    %236 = vector.shape_cast %235 : vector<8xf32> to vector<8x1xf32>
    %237 = tpu.reciprocal %236 {approx = true} : vector<8x1xf32> -> vector<8x1xf32>
    %238 = vector.broadcast %237 : vector<8x1xf32> to vector<8x8xf32>
    %239 = arith.mulf %234, %238 : vector<8x8xf32>
    %cst_108 = arith.constant dense<0.000000e+00> : vector<8x16xf32>
    %240 = tpu.matmul %239, %226, %cst_108 {dimension_numbers = #tpu.dot_dimension_numbers<[1], [0], [0], [1], [0, 0, 1, 1], [], []>} : vector<8x8xf32>, vector<8x16xf32>, vector<8x16xf32> -> vector<8x16xf32>
    %241 = vector.extract_strided_slice %200 {offsets = [16, 0], sizes = [16, 32], strides = [1, 1]} : vector<32x32xf32> to vector<16x32xf32>
    %cst_109 = arith.constant dense<0.000000e+00> : vector<8x32xf32>
    %242 = tpu.matmul %240, %241, %cst_109 {dimension_numbers = #tpu.dot_dimension_numbers<[1], [0], [0], [1], [0, 0, 1, 1], [], []>} : vector<8x16xf32>, vector<16x32xf32>, vector<8x32xf32> -> vector<8x32xf32>
    %243 = arith.addf %221, %242 : vector<8x32xf32>
    %c1_110 = arith.constant 1 : index
    %c0_111 = arith.constant 0 : index
    %c0_112 = arith.constant 0 : index
    %244 = vector.load %arg8[%c1_110, %c0_111, %c0_112] : memref<2x1x32xf32, #tpu.memory_space<vmem>>, vector<1x1x32xf32>
    %245 = vector.shape_cast %244 : vector<1x1x32xf32> to vector<1x32xf32>
    %246 = vector.broadcast %245 : vector<1x32xf32> to vector<8x32xf32>
    %247 = arith.addf %243, %246 : vector<8x32xf32>
    %248 = arith.addf %247, %191 : vector<8x32xf32>
    %c1_113 = arith.constant 1 : index
    %c0_114 = arith.constant 0 : index
    %c0_115 = arith.constant 0 : index
    %249 = vector.load %arg9[%c1_113, %c0_114, %c0_115] : memref<2x1x32xf32, #tpu.memory_space<vmem>>, vector<1x1x32xf32>
    %250 = vector.shape_cast %249 : vector<1x1x32xf32> to vector<1x32xf32>
    %c1_116 = arith.constant 1 : index
    %c0_117 = arith.constant 0 : index
    %c0_118 = arith.constant 0 : index
    %251 = vector.load %arg10[%c1_116, %c0_117, %c0_118] : memref<2x1x32xf32, #tpu.memory_space<vmem>>, vector<1x1x32xf32>
    %252 = vector.shape_cast %251 : vector<1x1x32xf32> to vector<1x32xf32>
    %cst_119 = arith.constant dense<0.000000e+00> : vector<8xf32>
    %253 = vector.multi_reduction <add>, %248, %cst_119 [1] : vector<8x32xf32> to vector<8xf32>
    %254 = vector.shape_cast %253 : vector<8xf32> to vector<8x1xf32>
    %cst_120 = arith.constant 3.200000e+01 : f32
    %255 = vector.broadcast %cst_120 : f32 to vector<8x1xf32>
    %256 = arith.divf %254, %255 : vector<8x1xf32>
    %257 = vector.broadcast %256 : vector<8x1xf32> to vector<8x32xf32>
    %258 = arith.subf %248, %257 : vector<8x32xf32>
    %259 = arith.mulf %258, %258 : vector<8x32xf32>
    %cst_121 = arith.constant dense<0.000000e+00> : vector<8xf32>
    %260 = vector.multi_reduction <add>, %259, %cst_121 [1] : vector<8x32xf32> to vector<8xf32>
    %261 = vector.shape_cast %260 : vector<8xf32> to vector<8x1xf32>
    %cst_122 = arith.constant 3.200000e+01 : f32
    %262 = vector.broadcast %cst_122 : f32 to vector<8x1xf32>
    %263 = arith.divf %261, %262 : vector<8x1xf32>
    %264 = vector.broadcast %256 : vector<8x1xf32> to vector<8x32xf32>
    %265 = arith.subf %248, %264 : vector<8x32xf32>
    %cst_123 = arith.constant 9.99999996E-13 : f32
    %266 = vector.broadcast %cst_123 : f32 to vector<8x1xf32>
    %267 = arith.addf %263, %266 : vector<8x1xf32>
    %268 = math.rsqrt %267 : vector<8x1xf32>
    %269 = vector.broadcast %268 : vector<8x1xf32> to vector<8x32xf32>
    %270 = arith.mulf %265, %269 : vector<8x32xf32>
    %271 = vector.broadcast %250 : vector<1x32xf32> to vector<8x32xf32>
    %272 = arith.mulf %270, %271 : vector<8x32xf32>
    %273 = vector.broadcast %252 : vector<1x32xf32> to vector<8x32xf32>
    %274 = arith.addf %272, %273 : vector<8x32xf32>
    %c1_124 = arith.constant 1 : index
    %c0_125 = arith.constant 0 : index
    %c0_126 = arith.constant 0 : index
    %275 = vector.load %arg11[%c1_124, %c0_125, %c0_126] : memref<2x32x64xf32, #tpu.memory_space<vmem>>, vector<1x32x64xf32>
    %276 = vector.shape_cast %275 : vector<1x32x64xf32> to vector<32x64xf32>
    %cst_127 = arith.constant dense<0.000000e+00> : vector<8x64xf32>
    %277 = tpu.matmul %274, %276, %cst_127 {dimension_numbers = #tpu.dot_dimension_numbers<[1], [0], [0], [1], [0, 0, 1, 1], [], []>} : vector<8x32xf32>, vector<32x64xf32>, vector<8x64xf32> -> vector<8x64xf32>
    %c1_128 = arith.constant 1 : index
    %c0_129 = arith.constant 0 : index
    %c0_130 = arith.constant 0 : index
    %278 = vector.load %arg12[%c1_128, %c0_129, %c0_130] : memref<2x1x64xf32, #tpu.memory_space<vmem>>, vector<1x1x64xf32>
    %279 = vector.shape_cast %278 : vector<1x1x64xf32> to vector<1x64xf32>
    %280 = vector.broadcast %279 : vector<1x64xf32> to vector<8x64xf32>
    %281 = arith.addf %277, %280 : vector<8x64xf32>
    %cst_131 = arith.constant 5.000000e-01 : f32
    %282 = vector.broadcast %cst_131 : f32 to vector<8x64xf32>
    %283 = arith.mulf %282, %281 : vector<8x64xf32>
    %cst_132 = arith.constant 0.707106769 : f32
    %284 = vector.broadcast %cst_132 : f32 to vector<8x64xf32>
    %285 = arith.mulf %281, %284 : vector<8x64xf32>
    %286 = math.absf %285 : vector<8x64xf32>
    %cst_133 = arith.constant 0.327591091 : f32
    %287 = vector.broadcast %cst_133 : f32 to vector<8x64xf32>
    %288 = arith.mulf %287, %286 : vector<8x64xf32>
    %cst_134 = arith.constant 1.000000e+00 : f32
    %289 = vector.broadcast %cst_134 : f32 to vector<8x64xf32>
    %290 = arith.addf %289, %288 : vector<8x64xf32>
    %cst_135 = arith.constant 1.000000e+00 : f32
    %291 = vector.broadcast %cst_135 : f32 to vector<8x64xf32>
    %292 = arith.divf %291, %290 : vector<8x64xf32>
    %cst_136 = arith.constant 1.06140542 : f32
    %293 = vector.broadcast %cst_136 : f32 to vector<8x64xf32>
    %294 = arith.mulf %293, %292 : vector<8x64xf32>
    %cst_137 = arith.constant -1.45315206 : f32
    %295 = vector.broadcast %cst_137 : f32 to vector<8x64xf32>
    %296 = arith.addf %294, %295 : vector<8x64xf32>
    %297 = arith.mulf %296, %292 : vector<8x64xf32>
    %cst_138 = arith.constant 1.42141378 : f32
    %298 = vector.broadcast %cst_138 : f32 to vector<8x64xf32>
    %299 = arith.addf %297, %298 : vector<8x64xf32>
    %300 = arith.mulf %299, %292 : vector<8x64xf32>
    %cst_139 = arith.constant -0.284496725 : f32
    %301 = vector.broadcast %cst_139 : f32 to vector<8x64xf32>
    %302 = arith.addf %300, %301 : vector<8x64xf32>
    %303 = arith.mulf %302, %292 : vector<8x64xf32>
    %cst_140 = arith.constant 0.254829586 : f32
    %304 = vector.broadcast %cst_140 : f32 to vector<8x64xf32>
    %305 = arith.addf %303, %304 : vector<8x64xf32>
    %306 = arith.mulf %305, %292 : vector<8x64xf32>
    %cst_141 = arith.constant 0.000000e+00 : f32
    %307 = vector.broadcast %cst_141 : f32 to vector<8x64xf32>
    %308 = arith.subf %307, %286 : vector<8x64xf32>
    %309 = arith.mulf %308, %286 : vector<8x64xf32>
    %310 = math.exp %309 : vector<8x64xf32>
    %311 = arith.mulf %306, %310 : vector<8x64xf32>
    %cst_142 = arith.constant 1.000000e+00 : f32
    %312 = vector.broadcast %cst_142 : f32 to vector<8x64xf32>
    %313 = arith.subf %312, %311 : vector<8x64xf32>
    %cst_143 = arith.constant 0.000000e+00 : f32
    %314 = vector.broadcast %cst_143 : f32 to vector<8x64xf32>
    %315 = arith.cmpf olt, %285, %314 : vector<8x64xf32>
    %cst_144 = arith.constant 0.000000e+00 : f32
    %316 = vector.broadcast %cst_144 : f32 to vector<8x64xf32>
    %317 = arith.subf %316, %313 : vector<8x64xf32>
    %318 = arith.select %315, %317, %313 : vector<8x64xi1>, vector<8x64xf32>
    %cst_145 = arith.constant 1.000000e+00 : f32
    %319 = vector.broadcast %cst_145 : f32 to vector<8x64xf32>
    %320 = arith.addf %319, %318 : vector<8x64xf32>
    %321 = arith.mulf %283, %320 : vector<8x64xf32>
    %c1_146 = arith.constant 1 : index
    %c0_147 = arith.constant 0 : index
    %c0_148 = arith.constant 0 : index
    %322 = vector.load %arg13[%c1_146, %c0_147, %c0_148] : memref<2x64x32xf32, #tpu.memory_space<vmem>>, vector<1x64x32xf32>
    %323 = vector.shape_cast %322 : vector<1x64x32xf32> to vector<64x32xf32>
    %cst_149 = arith.constant dense<0.000000e+00> : vector<8x32xf32>
    %324 = tpu.matmul %321, %323, %cst_149 {dimension_numbers = #tpu.dot_dimension_numbers<[1], [0], [0], [1], [0, 0, 1, 1], [], []>} : vector<8x64xf32>, vector<64x32xf32>, vector<8x32xf32> -> vector<8x32xf32>
    %c1_150 = arith.constant 1 : index
    %c0_151 = arith.constant 0 : index
    %c0_152 = arith.constant 0 : index
    %325 = vector.load %arg14[%c1_150, %c0_151, %c0_152] : memref<2x1x32xf32, #tpu.memory_space<vmem>>, vector<1x1x32xf32>
    %326 = vector.shape_cast %325 : vector<1x1x32xf32> to vector<1x32xf32>
    %327 = vector.broadcast %326 : vector<1x32xf32> to vector<8x32xf32>
    %328 = arith.addf %324, %327 : vector<8x32xf32>
    %329 = arith.addf %328, %274 : vector<8x32xf32>
    %c1_153 = arith.constant 1 : index
    %c0_154 = arith.constant 0 : index
    %c0_155 = arith.constant 0 : index
    %330 = vector.load %arg15[%c1_153, %c0_154, %c0_155] : memref<2x1x32xf32, #tpu.memory_space<vmem>>, vector<1x1x32xf32>
    %331 = vector.shape_cast %330 : vector<1x1x32xf32> to vector<1x32xf32>
    %c1_156 = arith.constant 1 : index
    %c0_157 = arith.constant 0 : index
    %c0_158 = arith.constant 0 : index
    %332 = vector.load %arg16[%c1_156, %c0_157, %c0_158] : memref<2x1x32xf32, #tpu.memory_space<vmem>>, vector<1x1x32xf32>
    %333 = vector.shape_cast %332 : vector<1x1x32xf32> to vector<1x32xf32>
    %cst_159 = arith.constant dense<0.000000e+00> : vector<8xf32>
    %334 = vector.multi_reduction <add>, %329, %cst_159 [1] : vector<8x32xf32> to vector<8xf32>
    %335 = vector.shape_cast %334 : vector<8xf32> to vector<8x1xf32>
    %cst_160 = arith.constant 3.200000e+01 : f32
    %336 = vector.broadcast %cst_160 : f32 to vector<8x1xf32>
    %337 = arith.divf %335, %336 : vector<8x1xf32>
    %338 = vector.broadcast %337 : vector<8x1xf32> to vector<8x32xf32>
    %339 = arith.subf %329, %338 : vector<8x32xf32>
    %340 = arith.mulf %339, %339 : vector<8x32xf32>
    %cst_161 = arith.constant dense<0.000000e+00> : vector<8xf32>
    %341 = vector.multi_reduction <add>, %340, %cst_161 [1] : vector<8x32xf32> to vector<8xf32>
    %342 = vector.shape_cast %341 : vector<8xf32> to vector<8x1xf32>
    %cst_162 = arith.constant 3.200000e+01 : f32
    %343 = vector.broadcast %cst_162 : f32 to vector<8x1xf32>
    %344 = arith.divf %342, %343 : vector<8x1xf32>
    %345 = vector.broadcast %337 : vector<8x1xf32> to vector<8x32xf32>
    %346 = arith.subf %329, %345 : vector<8x32xf32>
    %cst_163 = arith.constant 9.99999996E-13 : f32
    %347 = vector.broadcast %cst_163 : f32 to vector<8x1xf32>
    %348 = arith.addf %344, %347 : vector<8x1xf32>
    %349 = math.rsqrt %348 : vector<8x1xf32>
    %350 = vector.broadcast %349 : vector<8x1xf32> to vector<8x32xf32>
    %351 = arith.mulf %346, %350 : vector<8x32xf32>
    %352 = vector.broadcast %331 : vector<1x32xf32> to vector<8x32xf32>
    %353 = arith.mulf %351, %352 : vector<8x32xf32>
    %354 = vector.broadcast %333 : vector<1x32xf32> to vector<8x32xf32>
    %355 = arith.addf %353, %354 : vector<8x32xf32>
    %c0_164 = arith.constant 0 : index
    %c0_165 = arith.constant 0 : index
    %c0_166 = arith.constant 0 : index
    %356 = vector.load %arg17[%c0_164, %c0_165, %c0_166] : memref<1x8x32xf32, #tpu.memory_space<vmem>>, vector<1x8x32xf32>
    %357 = vector.shape_cast %356 : vector<1x8x32xf32> to vector<8x32xf32>
    %358 = vector.shape_cast %355 : vector<8x32xf32> to vector<1x8x32xf32>
    tpu.vector_store %arg17[%c0_164, %c0_165, %c0_166], %358 {strides = array<i32>} : memref<1x8x32xf32, #tpu.memory_space<vmem>>, vector<1x8x32xf32>,
    return
  }
  func.func @transform_0(%arg0: i32) -> (i32, i32, i32) {
    %c0_i32 = arith.constant 0 : i32
    %c0_i32_0 = arith.constant 0 : i32
    %c0_i32_1 = arith.constant 0 : i32
    return %arg0, %c0_i32, %c0_i32_0 : i32, i32, i32
  }
  func.func @transform_1(%arg0: i32) -> (i32, i32, i32) {
    %c0_i32 = arith.constant 0 : i32
    %c0_i32_0 = arith.constant 0 : i32
    %c0_i32_1 = arith.constant 0 : i32
    return %arg0, %c0_i32, %c0_i32_0 : i32, i32, i32
  }
  func.func @transform_2(%arg0: i32) -> (i32, i32) {
    %c0_i32 = arith.constant 0 : i32
    %c0_i32_0 = arith.constant 0 : i32
    %c0_i32_1 = arith.constant 0 : i32
    return %c0_i32, %c0_i32_0 : i32, i32
  }
  func.func @transform_3(%arg0: i32) -> (i32, i32) {
    %c0_i32 = arith.constant 0 : i32
    %c0_i32_0 = arith.constant 0 : i32
    %c0_i32_1 = arith.constant 0 : i32
    return %c0_i32, %c0_i32_0 : i32, i32
  }
  func.func @transform_4(%arg0: i32) -> (i32, i32, i32) {
    %c0_i32 = arith.constant 0 : i32
    %c0_i32_0 = arith.constant 0 : i32
    %c0_i32_1 = arith.constant 0 : i32
    %c0_i32_2 = arith.constant 0 : i32
    return %c0_i32, %c0_i32_0, %c0_i32_1 : i32, i32, i32
  }
  func.func @transform_5(%arg0: i32) -> (i32, i32, i32) {
    %c0_i32 = arith.constant 0 : i32
    %c0_i32_0 = arith.constant 0 : i32
    %c0_i32_1 = arith.constant 0 : i32
    %c0_i32_2 = arith.constant 0 : i32
    return %c0_i32, %c0_i32_0, %c0_i32_1 : i32, i32, i32
  }
  func.func @transform_6(%arg0: i32) -> (i32, i32, i32) {
    %c0_i32 = arith.constant 0 : i32
    %c0_i32_0 = arith.constant 0 : i32
    %c0_i32_1 = arith.constant 0 : i32
    %c0_i32_2 = arith.constant 0 : i32
    return %c0_i32, %c0_i32_0, %c0_i32_1 : i32, i32, i32
  }
  func.func @transform_7(%arg0: i32) -> (i32, i32, i32) {
    %c0_i32 = arith.constant 0 : i32
    %c0_i32_0 = arith.constant 0 : i32
    %c0_i32_1 = arith.constant 0 : i32
    %c0_i32_2 = arith.constant 0 : i32
    return %c0_i32, %c0_i32_0, %c0_i32_1 : i32, i32, i32
  }
  func.func @transform_8(%arg0: i32) -> (i32, i32, i32) {
    %c0_i32 = arith.constant 0 : i32
    %c0_i32_0 = arith.constant 0 : i32
    %c0_i32_1 = arith.constant 0 : i32
    %c0_i32_2 = arith.constant 0 : i32
    return %c0_i32, %c0_i32_0, %c0_i32_1 : i32, i32, i32
  }
  func.func @transform_9(%arg0: i32) -> (i32, i32, i32) {
    %c0_i32 = arith.constant 0 : i32
    %c0_i32_0 = arith.constant 0 : i32
    %c0_i32_1 = arith.constant 0 : i32
    %c0_i32_2 = arith.constant 0 : i32
    return %c0_i32, %c0_i32_0, %c0_i32_1 : i32, i32, i32
  }
  func.func @transform_10(%arg0: i32) -> (i32, i32, i32) {
    %c0_i32 = arith.constant 0 : i32
    %c0_i32_0 = arith.constant 0 : i32
    %c0_i32_1 = arith.constant 0 : i32
    %c0_i32_2 = arith.constant 0 : i32
    return %c0_i32, %c0_i32_0, %c0_i32_1 : i32, i32, i32
  }
  func.func @transform_11(%arg0: i32) -> (i32, i32, i32) {
    %c0_i32 = arith.constant 0 : i32
    %c0_i32_0 = arith.constant 0 : i32
    %c0_i32_1 = arith.constant 0 : i32
    %c0_i32_2 = arith.constant 0 : i32
    return %c0_i32, %c0_i32_0, %c0_i32_1 : i32, i32, i32
  }
  func.func @transform_12(%arg0: i32) -> (i32, i32, i32) {
    %c0_i32 = arith.constant 0 : i32
    %c0_i32_0 = arith.constant 0 : i32
    %c0_i32_1 = arith.constant 0 : i32
    %c0_i32_2 = arith.constant 0 : i32
    return %c0_i32, %c0_i32_0, %c0_i32_1 : i32, i32, i32
  }
  func.func @transform_13(%arg0: i32) -> (i32, i32, i32) {
    %c0_i32 = arith.constant 0 : i32
    %c0_i32_0 = arith.constant 0 : i32
    %c0_i32_1 = arith.constant 0 : i32
    %c0_i32_2 = arith.constant 0 : i32
    return %c0_i32, %c0_i32_0, %c0_i32_1 : i32, i32, i32
  }
  func.func @transform_14(%arg0: i32) -> (i32, i32, i32) {
    %c0_i32 = arith.constant 0 : i32
    %c0_i32_0 = arith.constant 0 : i32
    %c0_i32_1 = arith.constant 0 : i32
    %c0_i32_2 = arith.constant 0 : i32
    return %c0_i32, %c0_i32_0, %c0_i32_1 : i32, i32, i32
  }
  func.func @transform_15(%arg0: i32) -> (i32, i32, i32) {
    %c0_i32 = arith.constant 0 : i32
    %c0_i32_0 = arith.constant 0 : i32
    %c0_i32_1 = arith.constant 0 : i32
    %c0_i32_2 = arith.constant 0 : i32
    return %c0_i32, %c0_i32_0, %c0_i32_1 : i32, i32, i32
  }
  func.func @transform_16(%arg0: i32) -> (i32, i32, i32) {
    %c0_i32 = arith.constant 0 : i32
    %c0_i32_0 = arith.constant 0 : i32
    %c0_i32_1 = arith.constant 0 : i32
    return %arg0, %c0_i32, %c0_i32_0 : i32, i32, i32
  }
}

</mosaic_0001>

<llo_original>
// kernel: forward_both.1
$region0: #{forward_both.1}
  #allocation0 [shape = 'u32[]', space=smem, size = 0x4, offset = 0x4, fixed_abs, tag = 'smem constant byte address 0x4 - core index']
  #allocation1 [shape = 'u32[144,128]{1,0:T(1,128)}', space=vmem, size = 0x12000, scoped, tag = 'internal scratch']
  %s0 = inlined_call_operand.vmem [shape: f32[2,8,32], index: 0, kind: input, shape index: {}]
  %s1 = inlined_call_operand.vmem [shape: f32[2,1,8], index: 1, kind: input, shape index: {}]
  %s2 = inlined_call_operand.vmem [shape: f32[1,32], index: 2, kind: input, shape index: {}]
  %s3 = inlined_call_operand.vmem [shape: f32[1,32], index: 3, kind: input, shape index: {}]
  %s4 = inlined_call_operand.vmem [shape: f32[2,32,96], index: 4, kind: input, shape index: {}]
  %s5 = inlined_call_operand.vmem [shape: f32[2,1,96], index: 5, kind: input, shape index: {}]
  %s6 = inlined_call_operand.vmem [shape: f32[2,32,32], index: 6, kind: input, shape index: {}]
  %s7 = inlined_call_operand.vmem [shape: f32[2,1,32], index: 7, kind: input, shape index: {}]
  %s8 = inlined_call_operand.vmem [shape: f32[2,1,32], index: 8, kind: input, shape index: {}]
  %s9 = inlined_call_operand.vmem [shape: f32[2,1,32], index: 9, kind: input, shape index: {}]
  %s10 = inlined_call_operand.vmem [shape: f32[2,32,64], index: 10, kind: input, shape index: {}]
  %s11 = inlined_call_operand.vmem [shape: f32[2,1,64], index: 11, kind: input, shape index: {}]
  %s12 = inlined_call_operand.vmem [shape: f32[2,64,32], index: 12, kind: input, shape index: {}]
  %s13 = inlined_call_operand.vmem [shape: f32[2,1,32], index: 13, kind: input, shape index: {}]
  %s14 = inlined_call_operand.vmem [shape: f32[2,1,32], index: 14, kind: input, shape index: {}]
  %s15 = inlined_call_operand.vmem [shape: f32[2,1,32], index: 15, kind: input, shape index: {}]
  %s16 = inlined_call_operand.vmem [shape: f32[2,8,32], index: 16, kind: output, shape index: {}]
  %s17 = sld [smem:[#allocation0]]
  $region97: #{forward_both.1} parent=0
    _
  %s19 = ssub.s32 1, %s17
  %s20 = scalar_select 0, %s19, %s17
  loop: start=0, step=1, limit=4
  $region2: #{forward_both.1} parent=0 // loop_pre_header
    _
  $region3: #{forward_both.1} parent=0 // loop_header
    %s22 = sphi 0, %s26
    %p23 = scmp.ge.s32.totalorder %s22, 4
    %s32 = sphi 0, %s34
    %s35 = sphi 0, %s32
    %s36 = sphi 0, %s35
    %s52 = sphi 0, %s36
    %s58 = sphi 0, %s60
    %s61 = sphi 0, %s58
    %s62 = sphi 0, %s61
    %s78 = sphi 0, %s62
    %s82 = sphi 0, %s82
    %s84 = sphi 0, %s82
    %s85 = sphi 0, %s84
    %s99 = sphi 0, %s85
    %s103 = sphi 0, %s103
    %s105 = sphi 0, %s103
    %s106 = sphi 0, %s105
    %s120 = sphi 0, %s106
    %s124 = sphi 0, %s124
    %s126 = sphi 0, %s124
    %s127 = sphi 0, %s126
    %s141 = sphi 0, %s127
    %s145 = sphi 0, %s145
    %s147 = sphi 0, %s145
    %s148 = sphi 0, %s147
    %s162 = sphi 0, %s148
    %s166 = sphi 0, %s166
    %s168 = sphi 0, %s166
    %s169 = sphi 0, %s168
    %s183 = sphi 0, %s169
    %s187 = sphi 0, %s187
    %s189 = sphi 0, %s187
    %s190 = sphi 0, %s189
    %s204 = sphi 0, %s190
    %s208 = sphi 0, %s208
    %s210 = sphi 0, %s208
    %s211 = sphi 0, %s210
    %s225 = sphi 0, %s211
    %s229 = sphi 0, %s229
    %s231 = sphi 0, %s229
    %s232 = sphi 0, %s231
    %s246 = sphi 0, %s232
    %s250 = sphi 0, %s250
    %s252 = sphi 0, %s250
    %s253 = sphi 0, %s252
    %s267 = sphi 0, %s253
    %s271 = sphi 0, %s271
    %s273 = sphi 0, %s271
    %s274 = sphi 0, %s273
    %s288 = sphi 0, %s274
    %s292 = sphi 0, %s292
    %s294 = sphi 0, %s292
    %s295 = sphi 0, %s294
    %s309 = sphi 0, %s295
    %s313 = sphi 0, %s313
    %s315 = sphi 0, %s313
    %s316 = sphi 0, %s315
    %s330 = sphi 0, %s316
    %s334 = sphi 0, %s334
    %s336 = sphi 0, %s334
    %s337 = sphi 0, %s336
    %s351 = sphi 0, %s337
    %s355 = sphi 0, %s355
    %s357 = sphi 0, %s355
    %s358 = sphi 0, %s357
    %s372 = sphi 0, %s358
    %s378 = sphi 0, %s380
    %s381 = sphi 0, %s378
    %s382 = sphi 0, %s381
    %s398 = sphi 0, %s382
  $region4: #{forward_both.1} parent=0 // loop_header_branch
    %25 = sbr.rel (%p23) target = $region8
  $region5: #{forward_both.1} parent=0 // loop_body
    %s27 = ssub.s32 %s22, 1
    %s28 = ssub.s32 %s22, 2
    %s29 = sadd.s32 %s22, 1
    %s30 = ssub.s32 %s22, %s29
    %p31 = scmp.eq.s32.totalorder %s30, 0
    %s33 = sadd.s32 %s32, 1
    %s34 = scalar_select %p31, %s32, %s33
    %p37 = pneg %p31
    %p38 = scmp.eq.s32.totalorder %s22, 1
    %p39 = por %p37, %p38
    %p40 = scmp.ne.s32.totalorder %s32, %s35
    %p41 = scmp.eq.s32.totalorder %s22, 0
    %p42 = por %p40, %p41
    %p43 = scmp.ne.s32.totalorder %s32, %s35
    %p44 = scmp.eq.s32.totalorder %s27, 1
    %p45 = por %p43, %p44
    %p46 = scmp.ne.s32.totalorder %s35, %s36
    %p47 = scmp.eq.s32.totalorder %s27, 0
    %p48 = por %p46, %p47
    %p49 = scmp.ne.s32.totalorder %s35, %s36
    %p50 = scmp.eq.s32.totalorder %s28, 1
    %p51 = por %p49, %p50
    %p53 = scmp.ne.s32.totalorder %s36, %s52
    %p54 = scmp.eq.s32.totalorder %s28, 0
    %p55 = por %p53, %p54
    %s56 = ssub.s32 %s22, %s29
    %p57 = scmp.eq.s32.totalorder %s56, 0
    %s59 = sadd.s32 %s58, 1
    %s60 = scalar_select %p57, %s58, %s59
    %p63 = pneg %p57
    %p64 = scmp.eq.s32.totalorder %s22, 1
    %p65 = por %p63, %p64
    %p66 = scmp.ne.s32.totalorder %s58, %s61
    %p67 = scmp.eq.s32.totalorder %s22, 0
    %p68 = por %p66, %p67
    %p69 = scmp.ne.s32.totalorder %s58, %s61
    %p70 = scmp.eq.s32.totalorder %s27, 1
    %p71 = por %p69, %p70
    %p72 = scmp.ne.s32.totalorder %s61, %s62
    %p73 = scmp.eq.s32.totalorder %s27, 0
    %p74 = por %p72, %p73
    %p75 = scmp.ne.s32.totalorder %s61, %s62
    %p76 = scmp.eq.s32.totalorder %s28, 1
    %p77 = por %p75, %p76
    %p79 = scmp.ne.s32.totalorder %s62, %s78
    %p80 = scmp.eq.s32.totalorder %s28, 0
    %p81 = por %p79, %p80
    %s83 = sadd.s32 %s82, 1
    %p86 = scmp.eq.s32.totalorder %s22, 1
    %p87 = scmp.ne.s32.totalorder %s82, %s84
    %p88 = scmp.eq.s32.totalorder %s22, 0
    %p89 = por %p87, %p88
    %p90 = scmp.ne.s32.totalorder %s82, %s84
    %p91 = scmp.eq.s32.totalorder %s27, 1
    %p92 = por %p90, %p91
    %p93 = scmp.ne.s32.totalorder %s84, %s85
    %p94 = scmp.eq.s32.totalorder %s27, 0
    %p95 = por %p93, %p94
    %p96 = scmp.ne.s32.totalorder %s84, %s85
    %p97 = scmp.eq.s32.totalorder %s28, 1
    %p98 = por %p96, %p97
    %p100 = scmp.ne.s32.totalorder %s85, %s99
    %p101 = scmp.eq.s32.totalorder %s28, 0
    %p102 = por %p100, %p101
    %s104 = sadd.s32 %s103, 1
    %p107 = scmp.eq.s32.totalorder %s22, 1
    %p108 = scmp.ne.s32.totalorder %s103, %s105
    %p109 = scmp.eq.s32.totalorder %s22, 0
    %p110 = por %p108, %p109
    %p111 = scmp.ne.s32.totalorder %s103, %s105
    %p112 = scmp.eq.s32.totalorder %s27, 1
    %p113 = por %p111, %p112
    %p114 = scmp.ne.s32.totalorder %s105, %s106
    %p115 = scmp.eq.s32.totalorder %s27, 0
    %p116 = por %p114, %p115
    %p117 = scmp.ne.s32.totalorder %s105, %s106
    %p118 = scmp.eq.s32.totalorder %s28, 1
    %p119 = por %p117, %p118
    %p121 = scmp.ne.s32.totalorder %s106, %s120
    %p122 = scmp.eq.s32.totalorder %s28, 0
    %p123 = por %p121, %p122
    %s125 = sadd.s32 %s124, 1
    %p128 = scmp.eq.s32.totalorder %s22, 1
    %p129 = scmp.ne.s32.totalorder %s124, %s126
    %p130 = scmp.eq.s32.totalorder %s22, 0
    %p131 = por %p129, %p130
    %p132 = scmp.ne.s32.totalorder %s124, %s126
    %p133 = scmp.eq.s32.totalorder %s27, 1
    %p134 = por %p132, %p133
    %p135 = scmp.ne.s32.totalorder %s126, %s127
    %p136 = scmp.eq.s32.totalorder %s27, 0
    %p137 = por %p135, %p136
    %p138 = scmp.ne.s32.totalorder %s126, %s127
    %p139 = scmp.eq.s32.totalorder %s28, 1
    %p140 = por %p138, %p139
    %p142 = scmp.ne.s32.totalorder %s127, %s141
    %p143 = scmp.eq.s32.totalorder %s28, 0
    %p144 = por %p142, %p143
    %s146 = sadd.s32 %s145, 1
    %p149 = scmp.eq.s32.totalorder %s22, 1
    %p150 = scmp.ne.s32.totalorder %s145, %s147
    %p151 = scmp.eq.s32.totalorder %s22, 0
    %p152 = por %p150, %p151
    %p153 = scmp.ne.s32.totalorder %s145, %s147
    %p154 = scmp.eq.s32.totalorder %s27, 1
    %p155 = por %p153, %p154
    %p156 = scmp.ne.s32.totalorder %s147, %s148
    %p157 = scmp.eq.s32.totalorder %s27, 0
    %p158 = por %p156, %p157
    %p159 = scmp.ne.s32.totalorder %s147, %s148
    %p160 = scmp.eq.s32.totalorder %s28, 1
    %p161 = por %p159, %p160
    %p163 = scmp.ne.s32.totalorder %s148, %s162
    %p164 = scmp.eq.s32.totalorder %s28, 0
    %p165 = por %p163, %p164
    %s167 = sadd.s32 %s166, 1
    %p170 = scmp.eq.s32.totalorder %s22, 1
    %p171 = scmp.ne.s32.totalorder %s166, %s168
    %p172 = scmp.eq.s32.totalorder %s22, 0
    %p173 = por %p171, %p172
    %p174 = scmp.ne.s32.totalorder %s166, %s168
    %p175 = scmp.eq.s32.totalorder %s27, 1
    %p176 = por %p174, %p175
    %p177 = scmp.ne.s32.totalorder %s168, %s169
    %p178 = scmp.eq.s32.totalorder %s27, 0
    %p179 = por %p177, %p178
    %p180 = scmp.ne.s32.totalorder %s168, %s169
    %p181 = scmp.eq.s32.totalorder %s28, 1
    %p182 = por %p180, %p181
    %p184 = scmp.ne.s32.totalorder %s169, %s183
    %p185 = scmp.eq.s32.totalorder %s28, 0
    %p186 = por %p184, %p185
    %s188 = sadd.s32 %s187, 1
    %p191 = scmp.eq.s32.totalorder %s22, 1
    %p192 = scmp.ne.s32.totalorder %s187, %s189
    %p193 = scmp.eq.s32.totalorder %s22, 0
    %p194 = por %p192, %p193
    %p195 = scmp.ne.s32.totalorder %s187, %s189
    %p196 = scmp.eq.s32.totalorder %s27, 1
    %p197 = por %p195, %p196
    %p198 = scmp.ne.s32.totalorder %s189, %s190
    %p199 = scmp.eq.s32.totalorder %s27, 0
    %p200 = por %p198, %p199
    %p201 = scmp.ne.s32.totalorder %s189, %s190
    %p202 = scmp.eq.s32.totalorder %s28, 1
    %p203 = por %p201, %p202
    %p205 = scmp.ne.s32.totalorder %s190, %s204
    %p206 = scmp.eq.s32.totalorder %s28, 0
    %p207 = por %p205, %p206
    %s209 = sadd.s32 %s208, 1
    %p212 = scmp.eq.s32.totalorder %s22, 1
    %p213 = scmp.ne.s32.totalorder %s208, %s210
    %p214 = scmp.eq.s32.totalorder %s22, 0
    %p215 = por %p213, %p214
    %p216 = scmp.ne.s32.totalorder %s208, %s210
    %p217 = scmp.eq.s32.totalorder %s27, 1
    %p218 = por %p216, %p217
    %p219 = scmp.ne.s32.totalorder %s210, %s211
    %p220 = scmp.eq.s32.totalorder %s27, 0
    %p221 = por %p219, %p220
    %p222 = scmp.ne.s32.totalorder %s210, %s211
    %p223 = scmp.eq.s32.totalorder %s28, 1
    %p224 = por %p222, %p223
    %p226 = scmp.ne.s32.totalorder %s211, %s225
    %p227 = scmp.eq.s32.totalorder %s28, 0
    %p228 = por %p226, %p227
    %s230 = sadd.s32 %s229, 1
    %p233 = scmp.eq.s32.totalorder %s22, 1
    %p234 = scmp.ne.s32.totalorder %s229, %s231
    %p235 = scmp.eq.s32.totalorder %s22, 0
    %p236 = por %p234, %p235
    %p237 = scmp.ne.s32.totalorder %s229, %s231
    %p238 = scmp.eq.s32.totalorder %s27, 1
    %p239 = por %p237, %p238
    %p240 = scmp.ne.s32.totalorder %s231, %s232
    %p241 = scmp.eq.s32.totalorder %s27, 0
    %p242 = por %p240, %p241
    %p243 = scmp.ne.s32.totalorder %s231, %s232
    %p244 = scmp.eq.s32.totalorder %s28, 1
    %p245 = por %p243, %p244
    %p247 = scmp.ne.s32.totalorder %s232, %s246
    %p248 = scmp.eq.s32.totalorder %s28, 0
    %p249 = por %p247, %p248
    %s251 = sadd.s32 %s250, 1
    %p254 = scmp.eq.s32.totalorder %s22, 1
    %p255 = scmp.ne.s32.totalorder %s250, %s252
    %p256 = scmp.eq.s32.totalorder %s22, 0
    %p257 = por %p255, %p256
    %p258 = scmp.ne.s32.totalorder %s250, %s252
    %p259 = scmp.eq.s32.totalorder %s27, 1
    %p260 = por %p258, %p259
    %p261 = scmp.ne.s32.totalorder %s252, %s253
    %p262 = scmp.eq.s32.totalorder %s27, 0
    %p263 = por %p261, %p262
    %p264 = scmp.ne.s32.totalorder %s252, %s253
    %p265 = scmp.eq.s32.totalorder %s28, 1
    %p266 = por %p264, %p265
    %p268 = scmp.ne.s32.totalorder %s253, %s267
    %p269 = scmp.eq.s32.totalorder %s28, 0
    %p270 = por %p268, %p269
    %s272 = sadd.s32 %s271, 1
    %p275 = scmp.eq.s32.totalorder %s22, 1
    %p276 = scmp.ne.s32.totalorder %s271, %s273
    %p277 = scmp.eq.s32.totalorder %s22, 0
    %p278 = por %p276, %p277
    %p279 = scmp.ne.s32.totalorder %s271, %s273
    %p280 = scmp.eq.s32.totalorder %s27, 1
    %p281 = por %p279, %p280
    %p282 = scmp.ne.s32.totalorder %s273, %s274
    %p283 = scmp.eq.s32.totalorder %s27, 0
    %p284 = por %p282, %p283
    %p285 = scmp.ne.s32.totalorder %s273, %s274
    %p286 = scmp.eq.s32.totalorder %s28, 1
    %p287 = por %p285, %p286
    %p289 = scmp.ne.s32.totalorder %s274, %s288
    %p290 = scmp.eq.s32.totalorder %s28, 0
    %p291 = por %p289, %p290
    %s293 = sadd.s32 %s292, 1
    %p296 = scmp.eq.s32.totalorder %s22, 1
    %p297 = scmp.ne.s32.totalorder %s292, %s294
    %p298 = scmp.eq.s32.totalorder %s22, 0
    %p299 = por %p297, %p298
    %p300 = scmp.ne.s32.totalorder %s292, %s294
    %p301 = scmp.eq.s32.totalorder %s27, 1
    %p302 = por %p300, %p301
    %p303 = scmp.ne.s32.totalorder %s294, %s295
    %p304 = scmp.eq.s32.totalorder %s27, 0
    %p305 = por %p303, %p304
    %p306 = scmp.ne.s32.totalorder %s294, %s295
    %p307 = scmp.eq.s32.totalorder %s28, 1
    %p308 = por %p306, %p307
    %p310 = scmp.ne.s32.totalorder %s295, %s309
    %p311 = scmp.eq.s32.totalorder %s28, 0
    %p312 = por %p310, %p311
    %s314 = sadd.s32 %s313, 1
    %p317 = scmp.eq.s32.totalorder %s22, 1
    %p318 = scmp.ne.s32.totalorder %s313, %s315
    %p319 = scmp.eq.s32.totalorder %s22, 0
    %p320 = por %p318, %p319
    %p321 = scmp.ne.s32.totalorder %s313, %s315
    %p322 = scmp.eq.s32.totalorder %s27, 1
    %p323 = por %p321, %p322
    %p324 = scmp.ne.s32.totalorder %s315, %s316
    %p325 = scmp.eq.s32.totalorder %s27, 0
    %p326 = por %p324, %p325
    %p327 = scmp.ne.s32.totalorder %s315, %s316
    %p328 = scmp.eq.s32.totalorder %s28, 1
    %p329 = por %p327, %p328
    %p331 = scmp.ne.s32.totalorder %s316, %s330
    %p332 = scmp.eq.s32.totalorder %s28, 0
    %p333 = por %p331, %p332
    %s335 = sadd.s32 %s334, 1
    %p338 = scmp.eq.s32.totalorder %s22, 1
    %p339 = scmp.ne.s32.totalorder %s334, %s336
    %p340 = scmp.eq.s32.totalorder %s22, 0
    %p341 = por %p339, %p340
    %p342 = scmp.ne.s32.totalorder %s334, %s336
    %p343 = scmp.eq.s32.totalorder %s27, 1
    %p344 = por %p342, %p343
    %p345 = scmp.ne.s32.totalorder %s336, %s337
    %p346 = scmp.eq.s32.totalorder %s27, 0
    %p347 = por %p345, %p346
    %p348 = scmp.ne.s32.totalorder %s336, %s337
    %p349 = scmp.eq.s32.totalorder %s28, 1
    %p350 = por %p348, %p349
    %p352 = scmp.ne.s32.totalorder %s337, %s351
    %p353 = scmp.eq.s32.totalorder %s28, 0
    %p354 = por %p352, %p353
    %s356 = sadd.s32 %s355, 1
    %p359 = scmp.eq.s32.totalorder %s22, 1
    %p360 = scmp.ne.s32.totalorder %s355, %s357
    %p361 = scmp.eq.s32.totalorder %s22, 0
    %p362 = por %p360, %p361
    %p363 = scmp.ne.s32.totalorder %s355, %s357
    %p364 = scmp.eq.s32.totalorder %s27, 1
    %p365 = por %p363, %p364
    %p366 = scmp.ne.s32.totalorder %s357, %s358
    %p367 = scmp.eq.s32.totalorder %s27, 0
    %p368 = por %p366, %p367
    %p369 = scmp.ne.s32.totalorder %s357, %s358
    %p370 = scmp.eq.s32.totalorder %s28, 1
    %p371 = por %p369, %p370
    %p373 = scmp.ne.s32.totalorder %s358, %s372
    %p374 = scmp.eq.s32.totalorder %s28, 0
    %p375 = por %p373, %p374
    %s376 = ssub.s32 %s22, %s29
    %p377 = scmp.eq.s32.totalorder %s376, 0
    %s379 = sadd.s32 %s378, 1
    %s380 = scalar_select %p377, %s378, %s379
    %p383 = pneg %p377
    %p384 = scmp.eq.s32.totalorder %s22, 1
    %p385 = por %p383, %p384
    %p386 = scmp.ne.s32.totalorder %s378, %s381
    %p387 = scmp.eq.s32.totalorder %s22, 0
    %p388 = por %p386, %p387
    %p389 = scmp.ne.s32.totalorder %s378, %s381
    %p390 = scmp.eq.s32.totalorder %s27, 1
    %p391 = por %p389, %p390
    %p392 = scmp.ne.s32.totalorder %s381, %s382
    %p393 = scmp.eq.s32.totalorder %s27, 0
    %p394 = por %p392, %p393
    %p395 = scmp.ne.s32.totalorder %s381, %s382
    %p396 = scmp.eq.s32.totalorder %s28, 1
    %p397 = por %p395, %p396
    %p399 = scmp.ne.s32.totalorder %s382, %s398
    %p400 = scmp.eq.s32.totalorder %s28, 0
    %p401 = por %p399, %p400
    %p402 = scmp.le.s32.totalorder 1, %s22
    %p403 = scmp.lt.s32.totalorder %s22, 3
    %p404 = pnand %p402, %p403
    %p405 = pneg %p404
    // Predicated region
    $region9: #{forward_both.1} parent=5 // pred_check
      _
    $region10: #{forward_both.1} parent=5 // pred_check_branch
      %407 = sbr.rel (%p404) target = $region12
    $region11: #{forward_both.1} parent=5 // pred_region
      %s408 = ssub.s32 %s22, 1
      // Predicated region
      $region13: #{forward_both.1} parent=11 // pred_check
        %p409 = pneg %p95
      $region14: #{forward_both.1} parent=11 // pred_check_branch
        %411 = sbr.rel (%p409) target = $region16
      $region15: #{forward_both.1} parent=11 // pred_region
        _
      $region16: #{forward_both.1} parent=11 // pred_fallthru
        _
      // Predicated region
      $region17: #{forward_both.1} parent=11 // pred_check
        %p412 = pneg %p116
      $region18: #{forward_both.1} parent=11 // pred_check_branch
        %414 = sbr.rel (%p412) target = $region20
      $region19: #{forward_both.1} parent=11 // pred_region
        _
      $region20: #{forward_both.1} parent=11 // pred_fallthru
        _
      // Predicated region
      $region21: #{forward_both.1} parent=11 // pred_check
        %p415 = pneg %p137
      $region22: #{forward_both.1} parent=11 // pred_check_branch
        %417 = sbr.rel (%p415) target = $region24
      $region23: #{forward_both.1} parent=11 // pred_region
        _
      $region24: #{forward_both.1} parent=11 // pred_fallthru
        _
      // Predicated region
      $region25: #{forward_both.1} parent=11 // pred_check
        %p418 = pneg %p158
      $region26: #{forward_both.1} parent=11 // pred_check_branch
        %420 = sbr.rel (%p418) target = $region28
      $region27: #{forward_both.1} parent=11 // pred_region
        _
      $region28: #{forward_both.1} parent=11 // pred_fallthru
        _
      // Predicated region
      $region29: #{forward_both.1} parent=11 // pred_check
        %p421 = pneg %p179
      $region30: #{forward_both.1} parent=11 // pred_check_branch
        %423 = sbr.rel (%p421) target = $region32
      $region31: #{forward_both.1} parent=11 // pred_region
        _
      $region32: #{forward_both.1} parent=11 // pred_fallthru
        _
      // Predicated region
      $region33: #{forward_both.1} parent=11 // pred_check
        %p424 = pneg %p200
      $region34: #{forward_both.1} parent=11 // pred_check_branch
        %426 = sbr.rel (%p424) target = $region36
      $region35: #{forward_both.1} parent=11 // pred_region
        _
      $region36: #{forward_both.1} parent=11 // pred_fallthru
        _
      // Predicated region
      $region37: #{forward_both.1} parent=11 // pred_check
        %p427 = pneg %p221
      $region38: #{forward_both.1} parent=11 // pred_check_branch
        %429 = sbr.rel (%p427) target = $region40
      $region39: #{forward_both.1} parent=11 // pred_region
        _
      $region40: #{forward_both.1} parent=11 // pred_fallthru
        _
      // Predicated region
      $region41: #{forward_both.1} parent=11 // pred_check
        %p430 = pneg %p242
      $region42: #{forward_both.1} parent=11 // pred_check_branch
        %432 = sbr.rel (%p430) target = $region44
      $region43: #{forward_both.1} parent=11 // pred_region
        _
      $region44: #{forward_both.1} parent=11 // pred_fallthru
        _
      // Predicated region
      $region45: #{forward_both.1} parent=11 // pred_check
        %p433 = pneg %p263
      $region46: #{forward_both.1} parent=11 // pred_check_branch
        %435 = sbr.rel (%p433) target = $region48
      $region47: #{forward_both.1} parent=11 // pred_region
        _
      $region48: #{forward_both.1} parent=11 // pred_fallthru
        _
      // Predicated region
      $region49: #{forward_both.1} parent=11 // pred_check
        %p436 = pneg %p284
      $region50: #{forward_both.1} parent=11 // pred_check_branch
        %438 = sbr.rel (%p436) target = $region52
      $region51: #{forward_both.1} parent=11 // pred_region
        _
      $region52: #{forward_both.1} parent=11 // pred_fallthru
        _
      // Predicated region
      $region53: #{forward_both.1} parent=11 // pred_check
        %p439 = pneg %p305
      $region54: #{forward_both.1} parent=11 // pred_check_branch
        %441 = sbr.rel (%p439) target = $region56
      $region55: #{forward_both.1} parent=11 // pred_region
        _
      $region56: #{forward_both.1} parent=11 // pred_fallthru
        _
      // Predicated region
      $region57: #{forward_both.1} parent=11 // pred_check
        %p442 = pneg %p326
      $region58: #{forward_both.1} parent=11 // pred_check_branch
        %444 = sbr.rel (%p442) target = $region60
      $region59: #{forward_both.1} parent=11 // pred_region
        _
      $region60: #{forward_both.1} parent=11 // pred_fallthru
        _
      // Predicated region
      $region61: #{forward_both.1} parent=11 // pred_check
        %p445 = pneg %p347
      $region62: #{forward_both.1} parent=11 // pred_check_branch
        %447 = sbr.rel (%p445) target = $region64
      $region63: #{forward_both.1} parent=11 // pred_region
        _
      $region64: #{forward_both.1} parent=11 // pred_fallthru
        _
      // Predicated region
      $region65: #{forward_both.1} parent=11 // pred_check
        %p448 = pneg %p368
      $region66: #{forward_both.1} parent=11 // pred_check_branch
        %450 = sbr.rel (%p448) target = $region68
      $region67: #{forward_both.1} parent=11 // pred_region
        _
      $region68: #{forward_both.1} parent=11 // pred_fallthru
        _
    $region12: #{forward_both.1} parent=5 // pred_fallthru
      _
    %p451 = scmp.lt.s32.totalorder %s22, 2
    // Predicated region
    $region69: #{forward_both.1} parent=5 // pred_check
      %p452 = pneg %p451
    $region70: #{forward_both.1} parent=5 // pred_check_branch
      %454 = sbr.rel (%p452) target = $region72
    $region71: #{forward_both.1} parent=5 // pred_region
      // Predicated region
      $region73: #{forward_both.1} parent=71 // pred_check
        %p455 = pneg %p42
      $region74: #{forward_both.1} parent=71 // pred_check_branch
        %457 = sbr.rel (%p455) target = $region76
      $region75: #{forward_both.1} parent=71 // pred_region
        %p458 = scmp.lt.s32.totalorder %s22, 1
        %s459 = scalar_select %p458, %s22, 1
        %s460 = smul.addr %s459, 8
        %s461 = scalar_lea.vmem %s0, %s460
      $region76: #{forward_both.1} parent=71 // pred_fallthru
        _
      // Predicated region
      $region77: #{forward_both.1} parent=71 // pred_check
        %p462 = pneg %p68
      $region78: #{forward_both.1} parent=71 // pred_check_branch
        %464 = sbr.rel (%p462) target = $region80
      $region79: #{forward_both.1} parent=71 // pred_region
        %p465 = scmp.lt.s32.totalorder %s22, 1
        %s466 = scalar_select %p465, %s22, 1
        %s467 = scalar_lea.vmem %s1, %s466
      $region80: #{forward_both.1} parent=71 // pred_fallthru
        _
    $region72: #{forward_both.1} parent=5 // pred_fallthru
      _
    %p468 = scmp.le.s32.totalorder 1, %s22
    %p469 = scmp.lt.s32.totalorder %s22, 3
    %p470 = pnand %p468, %p469
    %p471 = pneg %p470
    // Predicated region
    $region81: #{forward_both.1} parent=5 // pred_check
      _
    $region82: #{forward_both.1} parent=5 // pred_check_branch
      %473 = sbr.rel (%p470) target = $region84
    $region83: #{forward_both.1} parent=5 // pred_region
      %s474 = ssub.s32 %s22, 1
      %p475 = scmp.lt.s32.totalorder %s27, 1
      %s476 = scalar_select %p475, %s27, 1
      %s477 = smul.addr %s476, 8
      %s478 = scalar_lea.vmem %s0, %s477
      %p479 = pneg %p48
      %p480 = pneg %p45
      %p481 = scmp.lt.s32.totalorder %s27, 1
      %s482 = scalar_select %p481, %s27, 1
      %s483 = scalar_lea.vmem %s1, %s482
      %p484 = pneg %p74
      %p485 = pneg %p71
      %p486 = pneg %p95
      %p487 = pneg %p92
      %p488 = pneg %p116
      %p489 = pneg %p113
      %p490 = pneg %p137
      %p491 = pneg %p134
      %p492 = pneg %p158
      %p493 = pneg %p155
      %p494 = pneg %p179
      %p495 = pneg %p176
      %p496 = pneg %p200
      %p497 = pneg %p197
      %p498 = pneg %p221
      %p499 = pneg %p218
      %p500 = pneg %p242
      %p501 = pneg %p239
      %p502 = pneg %p263
      %p503 = pneg %p260
      %p504 = pneg %p284
      %p505 = pneg %p281
      %p506 = pneg %p305
      %p507 = pneg %p302
      %p508 = pneg %p326
      %p509 = pneg %p323
      %p510 = pneg %p347
      %p511 = pneg %p344
      %p512 = pneg %p368
      %p513 = pneg %p365
      %p514 = pneg %p394
      %p515 = pneg %p391
      %p516 = scmp.lt.s32.totalorder %s27, 1
      %s517 = scalar_select %p516, %s27, 1
      %s518 = smul.addr %s517, 8
      %s519 = scalar_lea.vmem %s16, %s518
      %p520 = scmp.lt.s32.totalorder %s27, 1
      %s521 = scalar_select %p520, %s27, 1
      %s522 = smul.addr %s521, 8
      %s523 = scalar_lea.vmem %s0, %s522
      %p524 = scmp.lt.s32.totalorder %s27, 1
      %s525 = scalar_select %p524, %s27, 1
      %s526 = scalar_lea.vmem %s1, %s525
      %p527 = scmp.lt.s32.totalorder %s27, 1
      %s528 = scalar_select %p527, %s27, 1
      %s529 = smul.addr %s528, 8
      %s530 = scalar_lea.vmem %s16, %s529
      %v531 = vld [vmem:[%s523] sm:$0xff]
      %v532 = vld [vmem:[%s526] sm:$0x1]
      %v533 = vld [vmem:[%s2] sm:$0x1]
      %v534 = vld [vmem:[%s3] sm:$0x1]
      %vm535 = vcmask 261120
      %v536 = vsel %vm535, %v531, 0.0
      %537 = vadd.xlane.f32.xlu0 %v536
      %v538 = vpop.xlane.xlu0 %537
      %v539 = vrcp.pop 32.0
      %v540 = vmul.f32 %v538, %v539
      %v541 = vsub.f32 %v531, %v540
      %v542 = vmul.f32 %v541, %v541
      %v543 = vsel %vm535, %v542, 0.0
      %544 = vadd.xlane.f32.xlu0 %v543
      %v545 = vpop.xlane.xlu0 %544
      %v546 = vmul.f32 %v545, %v539
      %v547 = vadd.f32 %v546, 1e-12
      %v548 = vrsqrt.pop %v547
      %v549 = vmul.f32 %v541, %v548
      %v551 = vlaneseq
      %v552 = vshrl.u32 %v551, 7
      %v553 = vsub.s32 0, %v552
      %v554 = vrot.slane %v533, %v553
      %v556 = vmul.f32 %v549, %v554
      %v558 = vlaneseq
      %v559 = vshrl.u32 %v558, 7
      %v560 = vsub.s32 0, %v559
      %v561 = vrot.slane %v534, %v560
      %v563 = vadd.f32 %v556, %v561
      %v564 = vld [vmem:[%s4] sm:$0xff]
      %v565 = vld [vmem:[%s4 + $0x8] sm:$0xff]
      %v566 = vld [vmem:[%s4 + $0x10] sm:$0xff]
      %v567 = vld [vmem:[%s4 + $0x18] sm:$0xff]
      %v568 = vld [vmem:[%s5] sm:$0x1]
      %v570 = vlaneseq
      %v571 = vshrl.u32 %v570, 7
      %v572 = vsub.s32 0, %v571
      %v573 = vrot.slane %v568, %v572
      %v576 = vsel %vm535, %v563, 0
      %578 = vmatprep.subr.mxu0 0.0
      %579 = vmatpush1.msra.mxu0 0.0
      %580 = vmatprep.subr.mxu0 0.0
      %581 = vmatpush1.msra.mxu0 0.0
      %582 = vmatprep.subr.mxu0 0.0
      %583 = vmatpush1.msra.mxu0 0.0
      %584 = vmatprep.subr.mxu0 0.0
      %585 = vmatpush1.msra.mxu0 0.0
      %586 = vmatprep.subr.mxu0 0.0
      %587 = vmatpush1.msra.mxu0 0.0
      %588 = vmatprep.subr.mxu0 0.0
      %589 = vmatpush1.msra.mxu0 0.0
      %590 = vmatprep.subr.mxu0 0.0
      %591 = vmatpush1.msra.mxu0 0.0
      %592 = vmatprep.subr.mxu0 0.0
      %593 = vmatpush1.msra.mxu0 0.0
      %594 = vmatprep.subr.mxu0 0.0
      %595 = vmatpush1.msra.mxu0 0.0
      %596 = vmatprep.subr.mxu0 0.0
      %597 = vmatpush1.msra.mxu0 0.0
      %598 = vmatprep.subr.mxu0 0.0
      %599 = vmatpush1.msra.mxu0 0.0
      %600 = vmatprep.subr.mxu0 0.0
      %601 = vmatpush1.msra.mxu0 0.0
      %602 = vmatprep.subr.mxu0 0.0
      %603 = vmatpush1.msra.mxu0 %v567
      %604 = vmatprep.subr.mxu0 0.0
      %605 = vmatpush1.msra.mxu0 %v566
      %606 = vmatprep.subr.mxu0 0.0
      %607 = vmatpush1.msra.mxu0 %v565
      %608 = vmatprep.subr.mxu0 0.0
      %609 = vmatpush1.msra.mxu0 %v564
      %610 = vmatprep.subr.mxu0 0.0
      %611 = vmatpush2.msra.mxu0 0.0
      %612 = vmatprep.subr.mxu0 0.0
      %613 = vmatpush2.msra.mxu0 0.0
      %614 = vmatprep.subr.mxu0 0.0
      %615 = vmatpush2.msra.mxu0 0.0
      %616 = vmatprep.subr.mxu0 0.0
      %617 = vmatpush2.msra.mxu0 0.0
      %618 = vmatprep.subr.mxu0 0.0
      %619 = vmatpush2.msra.mxu0 0.0
      %620 = vmatprep.subr.mxu0 0.0
      %621 = vmatpush2.msra.mxu0 0.0
      %622 = vmatprep.subr.mxu0 0.0
      %623 = vmatpush2.msra.mxu0 0.0
      %624 = vmatprep.subr.mxu0 0.0
      %625 = vmatpush2.msra.mxu0 0.0
      %626 = vmatprep.subr.mxu0 0.0
      %627 = vmatpush2.msra.mxu0 0.0
      %628 = vmatprep.subr.mxu0 0.0
      %629 = vmatpush2.msra.mxu0 0.0
      %630 = vmatprep.subr.mxu0 0.0
      %631 = vmatpush2.msra.mxu0 0.0
      %632 = vmatprep.subr.mxu0 0.0
      %633 = vmatpush2.msra.mxu0 0.0
      %634 = vmatprep.subr.mxu0 0.0
      %635 = vmatpush2.msra.mxu0 0.0
      %636 = vmatprep.subr.mxu0 0.0
      %637 = vmatpush2.msra.mxu0 0.0
      %638 = vmatprep.subr.mxu0 0.0
      %639 = vmatpush2.msra.mxu0 0.0
      %640 = vmatprep.subr.mxu0 0.0
      %641 = vmatpush2.msra.mxu0 0.0
      %642 = vmatprep.mubr.f32.mxu0 0.0
      %643 = vmatmul.mubr.f32.gmra.mxu0 %v576
      %v644 = vpop.f32.mrf.mxu0
      %v645 = vadd.f32 %v573, %v644
      %v646 = vpop.f32.mrf.mxu0
      %647 = vdwg.mxu0
      %v648 = vld [vmem:[%s6] sm:$0xff]
      %v649 = vld [vmem:[%s6 + $0x8] sm:$0xff]
      %v650 = vld [vmem:[%s6 + $0x10] sm:$0xff]
      %v651 = vld [vmem:[%s6 + $0x18] sm:$0xff]
      %v652 = vmul.f32 %v645, 0.25
      %v654 = vlaneseq
      %v655 = vshrl.u32 %v654, 7
      %v656 = vsub.s32 0, %v655
      %v657 = vrot.slane %v532, %v656
      %660 = vrot.lane.b32.xlu0 %v645, 96
      %v661 = vpop.permute.xlu0 %660
      %vm662 = vcmask 130048
      %v664 = vsel %vm662, %v652, 0
      %v666 = vsel %vm662, %v661, 0
      %668 = vmatprep.subr.mxu0 0.0
      %669 = vmatpush1.xpose.msra.mxu0 0.0
      %670 = vmatprep.subr.mxu0 0.0
      %671 = vmatpush1.xpose.msra.mxu0 0.0
      %672 = vmatprep.subr.mxu0 0.0
      %673 = vmatpush1.xpose.msra.mxu0 0.0
      %674 = vmatprep.subr.mxu0 0.0
      %675 = vmatpush1.xpose.msra.mxu0 0.0
      %676 = vmatprep.subr.mxu0 0.0
      %677 = vmatpush1.xpose.msra.mxu0 0.0
      %678 = vmatprep.subr.mxu0 0.0
      %679 = vmatpush1.xpose.msra.mxu0 0.0
      %680 = vmatprep.subr.mxu0 0.0
      %681 = vmatpush1.xpose.msra.mxu0 0.0
      %682 = vmatprep.subr.mxu0 0.0
      %683 = vmatpush1.xpose.msra.mxu0 0.0
      %684 = vmatprep.subr.mxu0 0.0
      %685 = vmatpush1.xpose.msra.mxu0 0.0
      %686 = vmatprep.subr.mxu0 0.0
      %687 = vmatpush1.xpose.msra.mxu0 0.0
      %688 = vmatprep.subr.mxu0 0.0
      %689 = vmatpush1.xpose.msra.mxu0 0.0
      %690 = vmatprep.subr.mxu0 0.0
      %691 = vmatpush1.xpose.msra.mxu0 0.0
      %692 = vmatprep.subr.mxu0 0.0
      %693 = vmatpush1.xpose.msra.mxu0 0.0
      %694 = vmatprep.subr.mxu0 0.0
      %695 = vmatpush1.xpose.msra.mxu0 0.0
      %696 = vmatprep.subr.mxu0 0.0
      %697 = vmatpush1.xpose.msra.mxu0 0.0
      %698 = vmatprep.subr.mxu0 0.0
      %699 = vmatpush1.xpose.msra.mxu0 %v666
      %700 = vmatprep.subr.mxu0 0.0
      %701 = vmatpush2.xpose.msra.mxu0 0.0
      %702 = vmatprep.subr.mxu0 0.0
      %703 = vmatpush2.xpose.msra.mxu0 0.0
      %704 = vmatprep.subr.mxu0 0.0
      %705 = vmatpush2.xpose.msra.mxu0 0.0
      %706 = vmatprep.subr.mxu0 0.0
      %707 = vmatpush2.xpose.msra.mxu0 0.0
      %708 = vmatprep.subr.mxu0 0.0
      %709 = vmatpush2.xpose.msra.mxu0 0.0
      %710 = vmatprep.subr.mxu0 0.0
      %711 = vmatpush2.xpose.msra.mxu0 0.0
      %712 = vmatprep.subr.mxu0 0.0
      %713 = vmatpush2.xpose.msra.mxu0 0.0
      %714 = vmatprep.subr.mxu0 0.0
      %715 = vmatpush2.xpose.msra.mxu0 0.0
      %716 = vmatprep.subr.mxu0 0.0
      %717 = vmatpush2.xpose.msra.mxu0 0.0
      %718 = vmatprep.subr.mxu0 0.0
      %719 = vmatpush2.xpose.msra.mxu0 0.0
      %720 = vmatprep.subr.mxu0 0.0
      %721 = vmatpush2.xpose.msra.mxu0 0.0
      %722 = vmatprep.subr.mxu0 0.0
      %723 = vmatpush2.xpose.msra.mxu0 0.0
      %724 = vmatprep.subr.mxu0 0.0
      %725 = vmatpush2.xpose.msra.mxu0 0.0
      %726 = vmatprep.subr.mxu0 0.0
      %727 = vmatpush2.xpose.msra.mxu0 0.0
      %728 = vmatprep.subr.mxu0 0.0
      %729 = vmatpush2.xpose.msra.mxu0 0.0
      %730 = vmatprep.subr.mxu0 0.0
      %731 = vmatpush2.xpose.msra.mxu0 0.0
      %732 = vmatprep.mubr.f32.mxu0 0.0
      %733 = vmatmul.mubr.f32.gmra.mxu0 %v664
      %v734 = vpop.f32.mrf.mxu0
      %v735 = vadd.f32 %v657, %v734
      %v736 = vpop.f32.mrf.mxu0
      %737 = vdwg.mxu0
      %vm738 = vcmask 64512
      %v739 = vsel %vm738, %v735, -inf
      %740 = vmax.xlane.f32.xlu0 %v739
      %v741 = vpop.xlane.xlu0 %740
      %v742 = vsub.f32 %v735, %v741
      %v743 = vmul.f32 %v742, 1.442695
      %v744 = vpow.pop %v743
      %v745 = vsel %vm738, %v744, 0.0
      %746 = vadd.xlane.f32.xlu0 %v745
      %v747 = vpop.xlane.xlu0 %746
      %v748 = vrcp.pop %v747
      %v749 = vmul.f32 %v744, %v748
      %750 = vrot.lane.b32.xlu0 %v645, 64
      %v751 = vpop.permute.xlu0 %750
      %v754 = vsel %vm738, %v749, 0
      %756 = vmatprep.subr.mxu0 0.0
      %757 = vmatpush1.msra.mxu0 0.0
      %758 = vmatprep.subr.mxu0 0.0
      %759 = vmatpush1.msra.mxu0 0.0
      %760 = vmatprep.subr.mxu0 0.0
      %761 = vmatpush1.msra.mxu0 0.0
      %762 = vmatprep.subr.mxu0 0.0
      %763 = vmatpush1.msra.mxu0 0.0
      %764 = vmatprep.subr.mxu0 0.0
      %765 = vmatpush1.msra.mxu0 0.0
      %766 = vmatprep.subr.mxu0 0.0
      %767 = vmatpush1.msra.mxu0 0.0
      %768 = vmatprep.subr.mxu0 0.0
      %769 = vmatpush1.msra.mxu0 0.0
      %770 = vmatprep.subr.mxu0 0.0
      %771 = vmatpush1.msra.mxu0 0.0
      %772 = vmatprep.subr.mxu0 0.0
      %773 = vmatpush1.msra.mxu0 0.0
      %774 = vmatprep.subr.mxu0 0.0
      %775 = vmatpush1.msra.mxu0 0.0
      %776 = vmatprep.subr.mxu0 0.0
      %777 = vmatpush1.msra.mxu0 0.0
      %778 = vmatprep.subr.mxu0 0.0
      %779 = vmatpush1.msra.mxu0 0.0
      %780 = vmatprep.subr.mxu0 0.0
      %781 = vmatpush1.msra.mxu0 0.0
      %782 = vmatprep.subr.mxu0 0.0
      %783 = vmatpush1.msra.mxu0 0.0
      %784 = vmatprep.subr.mxu0 0.0
      %785 = vmatpush1.msra.mxu0 0.0
      %786 = vmatprep.subr.mxu0 0.0
      %787 = vmatpush1.msra.mxu0 %v751
      %788 = vmatprep.subr.mxu0 0.0
      %789 = vmatpush2.msra.mxu0 0.0
      %790 = vmatprep.subr.mxu0 0.0
      %791 = vmatpush2.msra.mxu0 0.0
      %792 = vmatprep.subr.mxu0 0.0
      %793 = vmatpush2.msra.mxu0 0.0
      %794 = vmatprep.subr.mxu0 0.0
      %795 = vmatpush2.msra.mxu0 0.0
      %796 = vmatprep.subr.mxu0 0.0
      %797 = vmatpush2.msra.mxu0 0.0
      %798 = vmatprep.subr.mxu0 0.0
      %799 = vmatpush2.msra.mxu0 0.0
      %800 = vmatprep.subr.mxu0 0.0
      %801 = vmatpush2.msra.mxu0 0.0
      %802 = vmatprep.subr.mxu0 0.0
      %803 = vmatpush2.msra.mxu0 0.0
      %804 = vmatprep.subr.mxu0 0.0
      %805 = vmatpush2.msra.mxu0 0.0
      %806 = vmatprep.subr.mxu0 0.0
      %807 = vmatpush2.msra.mxu0 0.0
      %808 = vmatprep.subr.mxu0 0.0
      %809 = vmatpush2.msra.mxu0 0.0
      %810 = vmatprep.subr.mxu0 0.0
      %811 = vmatpush2.msra.mxu0 0.0
      %812 = vmatprep.subr.mxu0 0.0
      %813 = vmatpush2.msra.mxu0 0.0
      %814 = vmatprep.subr.mxu0 0.0
      %815 = vmatpush2.msra.mxu0 0.0
      %816 = vmatprep.subr.mxu0 0.0
      %817 = vmatpush2.msra.mxu0 0.0
      %818 = vmatprep.subr.mxu0 0.0
      %819 = vmatpush2.msra.mxu0 0.0
      %820 = vmatprep.mubr.f32.mxu0 0.0
      %821 = vmatmul.mubr.f32.gmra.mxu0 %v754
      %v822 = vpop.f32.mrf.mxu0
      %v823 = vadd.f32 0.0, %v822
      %v824 = vpop.f32.mrf.mxu0
      %825 = vdwg.mxu0
      %826 = vrot.lane.b32.xlu0 %v652, 112
      %v827 = vpop.permute.xlu0 %826
      %828 = vrot.lane.b32.xlu0 %v645, 80
      %v829 = vpop.permute.xlu0 %828
      %v830 = vsel %vm662, %v827, 0
      %v832 = vsel %vm662, %v829, 0
      %834 = vmatprep.subr.mxu0 0.0
      %835 = vmatpush1.xpose.msra.mxu0 0.0
      %836 = vmatprep.subr.mxu0 0.0
      %837 = vmatpush1.xpose.msra.mxu0 0.0
      %838 = vmatprep.subr.mxu0 0.0
      %839 = vmatpush1.xpose.msra.mxu0 0.0
      %840 = vmatprep.subr.mxu0 0.0
      %841 = vmatpush1.xpose.msra.mxu0 0.0
      %842 = vmatprep.subr.mxu0 0.0
      %843 = vmatpush1.xpose.msra.mxu0 0.0
      %844 = vmatprep.subr.mxu0 0.0
      %845 = vmatpush1.xpose.msra.mxu0 0.0
      %846 = vmatprep.subr.mxu0 0.0
      %847 = vmatpush1.xpose.msra.mxu0 0.0
      %848 = vmatprep.subr.mxu0 0.0
      %849 = vmatpush1.xpose.msra.mxu0 0.0
      %850 = vmatprep.subr.mxu0 0.0
      %851 = vmatpush1.xpose.msra.mxu0 0.0
      %852 = vmatprep.subr.mxu0 0.0
      %853 = vmatpush1.xpose.msra.mxu0 0.0
      %854 = vmatprep.subr.mxu0 0.0
      %855 = vmatpush1.xpose.msra.mxu0 0.0
      %856 = vmatprep.subr.mxu0 0.0
      %857 = vmatpush1.xpose.msra.mxu0 0.0
      %858 = vmatprep.subr.mxu0 0.0
      %859 = vmatpush1.xpose.msra.mxu0 0.0
      %860 = vmatprep.subr.mxu0 0.0
      %861 = vmatpush1.xpose.msra.mxu0 0.0
      %862 = vmatprep.subr.mxu0 0.0
      %863 = vmatpush1.xpose.msra.mxu0 0.0
      %864 = vmatprep.subr.mxu0 0.0
      %865 = vmatpush1.xpose.msra.mxu0 %v832
      %866 = vmatprep.subr.mxu0 0.0
      %867 = vmatpush2.xpose.msra.mxu0 0.0
      %868 = vmatprep.subr.mxu0 0.0
      %869 = vmatpush2.xpose.msra.mxu0 0.0
      %870 = vmatprep.subr.mxu0 0.0
      %871 = vmatpush2.xpose.msra.mxu0 0.0
      %872 = vmatprep.subr.mxu0 0.0
      %873 = vmatpush2.xpose.msra.mxu0 0.0
      %874 = vmatprep.subr.mxu0 0.0
      %875 = vmatpush2.xpose.msra.mxu0 0.0
      %876 = vmatprep.subr.mxu0 0.0
      %877 = vmatpush2.xpose.msra.mxu0 0.0
      %878 = vmatprep.subr.mxu0 0.0
      %879 = vmatpush2.xpose.msra.mxu0 0.0
      %880 = vmatprep.subr.mxu0 0.0
      %881 = vmatpush2.xpose.msra.mxu0 0.0
      %882 = vmatprep.subr.mxu0 0.0
      %883 = vmatpush2.xpose.msra.mxu0 0.0
      %884 = vmatprep.subr.mxu0 0.0
      %885 = vmatpush2.xpose.msra.mxu0 0.0
      %886 = vmatprep.subr.mxu0 0.0
      %887 = vmatpush2.xpose.msra.mxu0 0.0
      %888 = vmatprep.subr.mxu0 0.0
      %889 = vmatpush2.xpose.msra.mxu0 0.0
      %890 = vmatprep.subr.mxu0 0.0
      %891 = vmatpush2.xpose.msra.mxu0 0.0
      %892 = vmatprep.subr.mxu0 0.0
      %893 = vmatpush2.xpose.msra.mxu0 0.0
      %894 = vmatprep.subr.mxu0 0.0
      %895 = vmatpush2.xpose.msra.mxu0 0.0
      %896 = vmatprep.subr.mxu0 0.0
      %897 = vmatpush2.xpose.msra.mxu0 0.0
      %898 = vmatprep.mubr.f32.mxu0 0.0
      %899 = vmatmul.mubr.f32.gmra.mxu0 %v830
      %v900 = vpop.f32.mrf.mxu0
      %v901 = vadd.f32 %v657, %v900
      %v902 = vpop.f32.mrf.mxu0
      %903 = vdwg.mxu0
      %v904 = vsel %vm738, %v901, -inf
      %905 = vmax.xlane.f32.xlu0 %v904
      %v906 = vpop.xlane.xlu0 %905
      %v907 = vsub.f32 %v901, %v906
      %v908 = vmul.f32 %v907, 1.442695
      %v909 = vpow.pop %v908
      %v910 = vsel %vm738, %v909, 0.0
      %911 = vadd.xlane.f32.xlu0 %v910
      %v912 = vpop.xlane.xlu0 %911
      %v913 = vrcp.pop %v912
      %v914 = vmul.f32 %v909, %v913
      %915 = vrot.lane.b32.xlu0 %v645, 48
      %v916 = vpop.permute.xlu0 %915
      %v919 = vsel %vm738, %v914, 0
      %921 = vmatprep.subr.mxu0 0.0
      %922 = vmatpush1.msra.mxu0 0.0
      %923 = vmatprep.subr.mxu0 0.0
      %924 = vmatpush1.msra.mxu0 0.0
      %925 = vmatprep.subr.mxu0 0.0
      %926 = vmatpush1.msra.mxu0 0.0
      %927 = vmatprep.subr.mxu0 0.0
      %928 = vmatpush1.msra.mxu0 0.0
      %929 = vmatprep.subr.mxu0 0.0
      %930 = vmatpush1.msra.mxu0 0.0
      %931 = vmatprep.subr.mxu0 0.0
      %932 = vmatpush1.msra.mxu0 0.0
      %933 = vmatprep.subr.mxu0 0.0
      %934 = vmatpush1.msra.mxu0 0.0
      %935 = vmatprep.subr.mxu0 0.0
      %936 = vmatpush1.msra.mxu0 0.0
      %937 = vmatprep.subr.mxu0 0.0
      %938 = vmatpush1.msra.mxu0 0.0
      %939 = vmatprep.subr.mxu0 0.0
      %940 = vmatpush1.msra.mxu0 0.0
      %941 = vmatprep.subr.mxu0 0.0
      %942 = vmatpush1.msra.mxu0 0.0
      %943 = vmatprep.subr.mxu0 0.0
      %944 = vmatpush1.msra.mxu0 0.0
      %945 = vmatprep.subr.mxu0 0.0
      %946 = vmatpush1.msra.mxu0 0.0
      %947 = vmatprep.subr.mxu0 0.0
      %948 = vmatpush1.msra.mxu0 0.0
      %949 = vmatprep.subr.mxu0 0.0
      %950 = vmatpush1.msra.mxu0 0.0
      %951 = vmatprep.subr.mxu0 0.0
      %952 = vmatpush1.msra.mxu0 %v916
      %953 = vmatprep.subr.mxu0 0.0
      %954 = vmatpush2.msra.mxu0 0.0
      %955 = vmatprep.subr.mxu0 0.0
      %956 = vmatpush2.msra.mxu0 0.0
      %957 = vmatprep.subr.mxu0 0.0
      %958 = vmatpush2.msra.mxu0 0.0
      %959 = vmatprep.subr.mxu0 0.0
      %960 = vmatpush2.msra.mxu0 0.0
      %961 = vmatprep.subr.mxu0 0.0
      %962 = vmatpush2.msra.mxu0 0.0
      %963 = vmatprep.subr.mxu0 0.0
      %964 = vmatpush2.msra.mxu0 0.0
      %965 = vmatprep.subr.mxu0 0.0
      %966 = vmatpush2.msra.mxu0 0.0
      %967 = vmatprep.subr.mxu0 0.0
      %968 = vmatpush2.msra.mxu0 0.0
      %969 = vmatprep.subr.mxu0 0.0
      %970 = vmatpush2.msra.mxu0 0.0
      %971 = vmatprep.subr.mxu0 0.0
      %972 = vmatpush2.msra.mxu0 0.0
      %973 = vmatprep.subr.mxu0 0.0
      %974 = vmatpush2.msra.mxu0 0.0
      %975 = vmatprep.subr.mxu0 0.0
      %976 = vmatpush2.msra.mxu0 0.0
      %977 = vmatprep.subr.mxu0 0.0
      %978 = vmatpush2.msra.mxu0 0.0
      %979 = vmatprep.subr.mxu0 0.0
      %980 = vmatpush2.msra.mxu0 0.0
      %981 = vmatprep.subr.mxu0 0.0
      %982 = vmatpush2.msra.mxu0 0.0
      %983 = vmatprep.subr.mxu0 0.0
      %984 = vmatpush2.msra.mxu0 0.0
      %985 = vmatprep.mubr.f32.mxu0 0.0
      %986 = vmatmul.mubr.f32.gmra.mxu0 %v919
      %v987 = vpop.f32.mrf.mxu0
      %v988 = vadd.f32 0.0, %v987
      %v989 = vpop.f32.mrf.mxu0
      %990 = vdwg.mxu0
      %v992 = vsel %vm662, %v988, 0
      %994 = vmatprep.subr.mxu0 0.0
      %995 = vmatpush1.msra.mxu0 0.0
      %996 = vmatprep.subr.mxu0 0.0
      %997 = vmatpush1.msra.mxu0 0.0
      %998 = vmatprep.subr.mxu0 0.0
      %999 = vmatpush1.msra.mxu0 0.0
      %1000 = vmatprep.subr.mxu0 0.0
      %1001 = vmatpush1.msra.mxu0 0.0
      %1002 = vmatprep.subr.mxu0 0.0
      %1003 = vmatpush1.msra.mxu0 0.0
      %1004 = vmatprep.subr.mxu0 0.0
      %1005 = vmatpush1.msra.mxu0 0.0
      %1006 = vmatprep.subr.mxu0 0.0
      %1007 = vmatpush1.msra.mxu0 0.0
      %1008 = vmatprep.subr.mxu0 0.0
      %1009 = vmatpush1.msra.mxu0 0.0
      %1010 = vmatprep.subr.mxu0 0.0
      %1011 = vmatpush1.msra.mxu0 0.0
      %1012 = vmatprep.subr.mxu0 0.0
      %1013 = vmatpush1.msra.mxu0 0.0
      %1014 = vmatprep.subr.mxu0 0.0
      %1015 = vmatpush1.msra.mxu0 0.0
      %1016 = vmatprep.subr.mxu0 0.0
      %1017 = vmatpush1.msra.mxu0 0.0
      %1018 = vmatprep.subr.mxu0 0.0
      %1019 = vmatpush1.msra.mxu0 0.0
      %1020 = vmatprep.subr.mxu0 0.0
      %1021 = vmatpush1.msra.mxu0 0.0
      %1022 = vmatprep.subr.mxu0 0.0
      %1023 = vmatpush1.msra.mxu0 %v651
      %1024 = vmatprep.subr.mxu0 0.0
      %1025 = vmatpush1.msra.mxu0 %v650
      %1026 = vmatprep.subr.mxu0 0.0
      %1027 = vmatpush2.msra.mxu0 0.0
      %1028 = vmatprep.subr.mxu0 0.0
      %1029 = vmatpush2.msra.mxu0 0.0
      %1030 = vmatprep.subr.mxu0 0.0
      %1031 = vmatpush2.msra.mxu0 0.0
      %1032 = vmatprep.subr.mxu0 0.0
      %1033 = vmatpush2.msra.mxu0 0.0
      %1034 = vmatprep.subr.mxu0 0.0
      %1035 = vmatpush2.msra.mxu0 0.0
      %1036 = vmatprep.subr.mxu0 0.0
      %1037 = vmatpush2.msra.mxu0 0.0
      %1038 = vmatprep.subr.mxu0 0.0
      %1039 = vmatpush2.msra.mxu0 0.0
      %1040 = vmatprep.subr.mxu0 0.0
      %1041 = vmatpush2.msra.mxu0 0.0
      %1042 = vmatprep.subr.mxu0 0.0
      %1043 = vmatpush2.msra.mxu0 0.0
      %1044 = vmatprep.subr.mxu0 0.0
      %1045 = vmatpush2.msra.mxu0 0.0
      %1046 = vmatprep.subr.mxu0 0.0
      %1047 = vmatpush2.msra.mxu0 0.0
      %1048 = vmatprep.subr.mxu0 0.0
      %1049 = vmatpush2.msra.mxu0 0.0
      %1050 = vmatprep.subr.mxu0 0.0
      %1051 = vmatpush2.msra.mxu0 0.0
      %1052 = vmatprep.subr.mxu0 0.0
      %1053 = vmatpush2.msra.mxu0 0.0
      %1054 = vmatprep.subr.mxu0 0.0
      %1055 = vmatpush2.msra.mxu0 0.0
      %1056 = vmatprep.subr.mxu0 0.0
      %1057 = vmatpush2.msra.mxu0 0.0
      %1058 = vmatprep.mubr.f32.mxu0 0.0
      %1059 = vmatmul.mubr.f32.gmra.mxu0 %v992
      %v1060 = vpop.f32.mrf.mxu0
      %v1061 = vadd.f32 0.0, %v1060
      %v1062 = vpop.f32.mrf.mxu0
      %1063 = vdwg.mxu0
      %v1065 = vsel %vm662, %v823, 0
      %1067 = vmatprep.subr.mxu0 0.0
      %1068 = vmatpush1.msra.mxu0 0.0
      %1069 = vmatprep.subr.mxu0 0.0
      %1070 = vmatpush1.msra.mxu0 0.0
      %1071 = vmatprep.subr.mxu0 0.0
      %1072 = vmatpush1.msra.mxu0 0.0
      %1073 = vmatprep.subr.mxu0 0.0
      %1074 = vmatpush1.msra.mxu0 0.0
      %1075 = vmatprep.subr.mxu0 0.0
      %1076 = vmatpush1.msra.mxu0 0.0
      %1077 = vmatprep.subr.mxu0 0.0
      %1078 = vmatpush1.msra.mxu0 0.0
      %1079 = vmatprep.subr.mxu0 0.0
      %1080 = vmatpush1.msra.mxu0 0.0
      %1081 = vmatprep.subr.mxu0 0.0
      %1082 = vmatpush1.msra.mxu0 0.0
      %1083 = vmatprep.subr.mxu0 0.0
      %1084 = vmatpush1.msra.mxu0 0.0
      %1085 = vmatprep.subr.mxu0 0.0
      %1086 = vmatpush1.msra.mxu0 0.0
      %1087 = vmatprep.subr.mxu0 0.0
      %1088 = vmatpush1.msra.mxu0 0.0
      %1089 = vmatprep.subr.mxu0 0.0
      %1090 = vmatpush1.msra.mxu0 0.0
      %1091 = vmatprep.subr.mxu0 0.0
      %1092 = vmatpush1.msra.mxu0 0.0
      %1093 = vmatprep.subr.mxu0 0.0
      %1094 = vmatpush1.msra.mxu0 0.0
      %1095 = vmatprep.subr.mxu0 0.0
      %1096 = vmatpush1.msra.mxu0 %v649
      %1097 = vmatprep.subr.mxu0 0.0
      %1098 = vmatpush1.msra.mxu0 %v648
      %1099 = vmatprep.subr.mxu0 0.0
      %1100 = vmatpush2.msra.mxu0 0.0
      %1101 = vmatprep.subr.mxu0 0.0
      %1102 = vmatpush2.msra.mxu0 0.0
      %1103 = vmatprep.subr.mxu0 0.0
      %1104 = vmatpush2.msra.mxu0 0.0
      %1105 = vmatprep.subr.mxu0 0.0
      %1106 = vmatpush2.msra.mxu0 0.0
      %1107 = vmatprep.subr.mxu0 0.0
      %1108 = vmatpush2.msra.mxu0 0.0
      %1109 = vmatprep.subr.mxu0 0.0
      %1110 = vmatpush2.msra.mxu0 0.0
      %1111 = vmatprep.subr.mxu0 0.0
      %1112 = vmatpush2.msra.mxu0 0.0
      %1113 = vmatprep.subr.mxu0 0.0
      %1114 = vmatpush2.msra.mxu0 0.0
      %1115 = vmatprep.subr.mxu0 0.0
      %1116 = vmatpush2.msra.mxu0 0.0
      %1117 = vmatprep.subr.mxu0 0.0
      %1118 = vmatpush2.msra.mxu0 0.0
      %1119 = vmatprep.subr.mxu0 0.0
      %1120 = vmatpush2.msra.mxu0 0.0
      %1121 = vmatprep.subr.mxu0 0.0
      %1122 = vmatpush2.msra.mxu0 0.0
      %1123 = vmatprep.subr.mxu0 0.0
      %1124 = vmatpush2.msra.mxu0 0.0
      %1125 = vmatprep.subr.mxu0 0.0
      %1126 = vmatpush2.msra.mxu0 0.0
      %1127 = vmatprep.subr.mxu0 0.0
      %1128 = vmatpush2.msra.mxu0 0.0
      %1129 = vmatprep.subr.mxu0 0.0
      %1130 = vmatpush2.msra.mxu0 0.0
      %1131 = vmatprep.mubr.f32.mxu0 0.0
      %1132 = vmatmul.mubr.f32.gmra.mxu0 %v1065
      %v1133 = vpop.f32.mrf.mxu0
      %v1134 = vadd.f32 %v1061, %v1133
      %v1135 = vpop.f32.mrf.mxu0
      %1136 = vdwg.mxu0
      %v1137 = vld [vmem:[%s7] sm:$0x1]
      %v1139 = vlaneseq
      %v1140 = vshrl.u32 %v1139, 7
      %v1141 = vsub.s32 0, %v1140
      %v1142 = vrot.slane %v1137, %v1141
      %v1144 = vadd.f32 %v1134, %v1142
      %v1145 = vadd.f32 %v1144, %v563
      %v1146 = vld [vmem:[%s8] sm:$0x1]
      %v1147 = vld [vmem:[%s9] sm:$0x1]
      %v1148 = vsel %vm535, %v1145, 0.0
      %1149 = vadd.xlane.f32.xlu0 %v1148
      %v1150 = vpop.xlane.xlu0 %1149
      %v1151 = vmul.f32 %v1150, %v539
      %v1152 = vsub.f32 %v1145, %v1151
      %v1153 = vmul.f32 %v1152, %v1152
      %v1154 = vsel %vm535, %v1153, 0.0
      %1155 = vadd.xlane.f32.xlu0 %v1154
      %v1156 = vpop.xlane.xlu0 %1155
      %v1157 = vmul.f32 %v1156, %v539
      %v1158 = vadd.f32 %v1157, 1e-12
      %v1159 = vrsqrt.pop %v1158
      %v1160 = vmul.f32 %v1152, %v1159
      %v1162 = vlaneseq
      %v1163 = vshrl.u32 %v1162, 7
      %v1164 = vsub.s32 0, %v1163
      %v1165 = vrot.slane %v1146, %v1164
      %v1167 = vmul.f32 %v1160, %v1165
      %v1169 = vlaneseq
      %v1170 = vshrl.u32 %v1169, 7
      %v1171 = vsub.s32 0, %v1170
      %v1172 = vrot.slane %v1147, %v1171
      %v1174 = vadd.f32 %v1167, %v1172
      %v1175 = vld [vmem:[%s10] sm:$0xff]
      %v1176 = vld [vmem:[%s10 + $0x8] sm:$0xff]
      %v1177 = vld [vmem:[%s10 + $0x10] sm:$0xff]
      %v1178 = vld [vmem:[%s10 + $0x18] sm:$0xff]
      %v1179 = vld [vmem:[%s11] sm:$0x1]
      %v1181 = vlaneseq
      %v1182 = vshrl.u32 %v1181, 7
      %v1183 = vsub.s32 0, %v1182
      %v1184 = vrot.slane %v1179, %v1183
      %v1187 = vsel %vm535, %v1174, 0
      %1189 = vmatprep.subr.mxu0 0.0
      %1190 = vmatpush1.msra.mxu0 0.0
      %1191 = vmatprep.subr.mxu0 0.0
      %1192 = vmatpush1.msra.mxu0 0.0
      %1193 = vmatprep.subr.mxu0 0.0
      %1194 = vmatpush1.msra.mxu0 0.0
      %1195 = vmatprep.subr.mxu0 0.0
      %1196 = vmatpush1.msra.mxu0 0.0
      %1197 = vmatprep.subr.mxu0 0.0
      %1198 = vmatpush1.msra.mxu0 0.0
      %1199 = vmatprep.subr.mxu0 0.0
      %1200 = vmatpush1.msra.mxu0 0.0
      %1201 = vmatprep.subr.mxu0 0.0
      %1202 = vmatpush1.msra.mxu0 0.0
      %1203 = vmatprep.subr.mxu0 0.0
      %1204 = vmatpush1.msra.mxu0 0.0
      %1205 = vmatprep.subr.mxu0 0.0
      %1206 = vmatpush1.msra.mxu0 0.0
      %1207 = vmatprep.subr.mxu0 0.0
      %1208 = vmatpush1.msra.mxu0 0.0
      %1209 = vmatprep.subr.mxu0 0.0
      %1210 = vmatpush1.msra.mxu0 0.0
      %1211 = vmatprep.subr.mxu0 0.0
      %1212 = vmatpush1.msra.mxu0 0.0
      %1213 = vmatprep.subr.mxu0 0.0
      %1214 = vmatpush1.msra.mxu0 %v1178
      %1215 = vmatprep.subr.mxu0 0.0
      %1216 = vmatpush1.msra.mxu0 %v1177
      %1217 = vmatprep.subr.mxu0 0.0
      %1218 = vmatpush1.msra.mxu0 %v1176
      %1219 = vmatprep.subr.mxu0 0.0
      %1220 = vmatpush1.msra.mxu0 %v1175
      %1221 = vmatprep.subr.mxu0 0.0
      %1222 = vmatpush2.msra.mxu0 0.0
      %1223 = vmatprep.subr.mxu0 0.0
      %1224 = vmatpush2.msra.mxu0 0.0
      %1225 = vmatprep.subr.mxu0 0.0
      %1226 = vmatpush2.msra.mxu0 0.0
      %1227 = vmatprep.subr.mxu0 0.0
      %1228 = vmatpush2.msra.mxu0 0.0
      %1229 = vmatprep.subr.mxu0 0.0
      %1230 = vmatpush2.msra.mxu0 0.0
      %1231 = vmatprep.subr.mxu0 0.0
      %1232 = vmatpush2.msra.mxu0 0.0
      %1233 = vmatprep.subr.mxu0 0.0
      %1234 = vmatpush2.msra.mxu0 0.0
      %1235 = vmatprep.subr.mxu0 0.0
      %1236 = vmatpush2.msra.mxu0 0.0
      %1237 = vmatprep.subr.mxu0 0.0
      %1238 = vmatpush2.msra.mxu0 0.0
      %1239 = vmatprep.subr.mxu0 0.0
      %1240 = vmatpush2.msra.mxu0 0.0
      %1241 = vmatprep.subr.mxu0 0.0
      %1242 = vmatpush2.msra.mxu0 0.0
      %1243 = vmatprep.subr.mxu0 0.0
      %1244 = vmatpush2.msra.mxu0 0.0
      %1245 = vmatprep.subr.mxu0 0.0
      %1246 = vmatpush2.msra.mxu0 0.0
      %1247 = vmatprep.subr.mxu0 0.0
      %1248 = vmatpush2.msra.mxu0 0.0
      %1249 = vmatprep.subr.mxu0 0.0
      %1250 = vmatpush2.msra.mxu0 0.0
      %1251 = vmatprep.subr.mxu0 0.0
      %1252 = vmatpush2.msra.mxu0 0.0
      %1253 = vmatprep.mubr.f32.mxu0 0.0
      %1254 = vmatmul.mubr.f32.gmra.mxu0 %v1187
      %v1255 = vpop.f32.mrf.mxu0
      %v1256 = vadd.f32 %v1184, %v1255
      %v1257 = vpop.f32.mrf.mxu0
      %1258 = vdwg.mxu0
      %v1259 = vmul.f32 %v1256, 0.5
      %v1260 = vmul.f32 %v1256, 0.70710677
      %v1261 = vand.u32 2147483647, %v1260
      %v1262 = vmul.f32 %v1261, 0.3275911
      %v1263 = vadd.f32 %v1262, 1.0
      %v1264 = vrcp.pop %v1263
      %v1265 = vmul.f32 1.0, %v1264
      %v1266 = vmul.f32 %v1265, 1.0614054
      %v1267 = vadd.f32 %v1266, -1.4531521
      %v1268 = vmul.f32 %v1267, %v1265
      %v1269 = vadd.f32 %v1268, 1.4214138
      %v1270 = vmul.f32 %v1269, %v1265
      %v1271 = vadd.f32 %v1270, -0.28449672
      %v1272 = vmul.f32 %v1271, %v1265
      %v1273 = vadd.f32 %v1272, 0.2548296
      %v1274 = vmul.f32 %v1273, %v1265
      %v1275 = vsub.f32 0.0, %v1261
      %v1276 = vmul.f32 %v1275, %v1261
      %v1277 = vmul.f32 %v1276, 1.442695
      %v1278 = vpow.pop %v1277
      %v1279 = vmul.f32 %v1274, %v1278
      %v1280 = vsub.f32 1.0, %v1279
      %vm1281 = vcmp.lt.f32.partialorder %v1260, 0.0
      %v1282 = vsub.f32 0.0, %v1280
      %v1283 = vsel %vm1281, %v1282, %v1280
      %v1284 = vadd.f32 %v1283, 1.0
      %v1285 = vmul.f32 %v1259, %v1284
      %v1286 = vld [vmem:[%s12] sm:$0xff]
      %v1287 = vld [vmem:[%s12 + $0x8] sm:$0xff]
      %v1288 = vld [vmem:[%s12 + $0x10] sm:$0xff]
      %v1289 = vld [vmem:[%s12 + $0x18] sm:$0xff]
      %v1290 = vld [vmem:[%s12 + $0x20] sm:$0xff]
      %v1291 = vld [vmem:[%s12 + $0x28] sm:$0xff]
      %v1292 = vld [vmem:[%s12 + $0x30] sm:$0xff]
      %v1293 = vld [vmem:[%s12 + $0x38] sm:$0xff]
      %v1294 = vld [vmem:[%s13] sm:$0x1]
      %v1296 = vlaneseq
      %v1297 = vshrl.u32 %v1296, 7
      %v1298 = vsub.s32 0, %v1297
      %v1299 = vrot.slane %v1294, %v1298
      %vm1301 = vcmask 523264
      %v1303 = vsel %vm1301, %v1285, 0
      %1305 = vmatprep.subr.mxu0 0.0
      %1306 = vmatpush1.msra.mxu0 0.0
      %1307 = vmatprep.subr.mxu0 0.0
      %1308 = vmatpush1.msra.mxu0 0.0
      %1309 = vmatprep.subr.mxu0 0.0
      %1310 = vmatpush1.msra.mxu0 0.0
      %1311 = vmatprep.subr.mxu0 0.0
      %1312 = vmatpush1.msra.mxu0 0.0
      %1313 = vmatprep.subr.mxu0 0.0
      %1314 = vmatpush1.msra.mxu0 0.0
      %1315 = vmatprep.subr.mxu0 0.0
      %1316 = vmatpush1.msra.mxu0 0.0
      %1317 = vmatprep.subr.mxu0 0.0
      %1318 = vmatpush1.msra.mxu0 0.0
      %1319 = vmatprep.subr.mxu0 0.0
      %1320 = vmatpush1.msra.mxu0 0.0
      %1321 = vmatprep.subr.mxu0 0.0
      %1322 = vmatpush1.msra.mxu0 %v1293
      %1323 = vmatprep.subr.mxu0 0.0
      %1324 = vmatpush1.msra.mxu0 %v1292
      %1325 = vmatprep.subr.mxu0 0.0
      %1326 = vmatpush1.msra.mxu0 %v1291
      %1327 = vmatprep.subr.mxu0 0.0
      %1328 = vmatpush1.msra.mxu0 %v1290
      %1329 = vmatprep.subr.mxu0 0.0
      %1330 = vmatpush1.msra.mxu0 %v1289
      %1331 = vmatprep.subr.mxu0 0.0
      %1332 = vmatpush1.msra.mxu0 %v1288
      %1333 = vmatprep.subr.mxu0 0.0
      %1334 = vmatpush1.msra.mxu0 %v1287
      %1335 = vmatprep.subr.mxu0 0.0
      %1336 = vmatpush1.msra.mxu0 %v1286
      %1337 = vmatprep.subr.mxu0 0.0
      %1338 = vmatpush2.msra.mxu0 0.0
      %1339 = vmatprep.subr.mxu0 0.0
      %1340 = vmatpush2.msra.mxu0 0.0
      %1341 = vmatprep.subr.mxu0 0.0
      %1342 = vmatpush2.msra.mxu0 0.0
      %1343 = vmatprep.subr.mxu0 0.0
      %1344 = vmatpush2.msra.mxu0 0.0
      %1345 = vmatprep.subr.mxu0 0.0
      %1346 = vmatpush2.msra.mxu0 0.0
      %1347 = vmatprep.subr.mxu0 0.0
      %1348 = vmatpush2.msra.mxu0 0.0
      %1349 = vmatprep.subr.mxu0 0.0
      %1350 = vmatpush2.msra.mxu0 0.0
      %1351 = vmatprep.subr.mxu0 0.0
      %1352 = vmatpush2.msra.mxu0 0.0
      %1353 = vmatprep.subr.mxu0 0.0
      %1354 = vmatpush2.msra.mxu0 0.0
      %1355 = vmatprep.subr.mxu0 0.0
      %1356 = vmatpush2.msra.mxu0 0.0
      %1357 = vmatprep.subr.mxu0 0.0
      %1358 = vmatpush2.msra.mxu0 0.0
      %1359 = vmatprep.subr.mxu0 0.0
      %1360 = vmatpush2.msra.mxu0 0.0
      %1361 = vmatprep.subr.mxu0 0.0
      %1362 = vmatpush2.msra.mxu0 0.0
      %1363 = vmatprep.subr.mxu0 0.0
      %1364 = vmatpush2.msra.mxu0 0.0
      %1365 = vmatprep.subr.mxu0 0.0
      %1366 = vmatpush2.msra.mxu0 0.0
      %1367 = vmatprep.subr.mxu0 0.0
      %1368 = vmatpush2.msra.mxu0 0.0
      %1369 = vmatprep.mubr.f32.mxu0 0.0
      %1370 = vmatmul.mubr.f32.gmra.mxu0 %v1303
      %v1371 = vpop.f32.mrf.mxu0
      %v1372 = vadd.f32 %v1299, %v1371
      %v1373 = vpop.f32.mrf.mxu0
      %1374 = vdwg.mxu0
      %v1375 = vadd.f32 %v1372, %v1174
      %v1376 = vld [vmem:[%s14] sm:$0x1]
      %v1377 = vld [vmem:[%s15] sm:$0x1]
      %v1378 = vsel %vm535, %v1375, 0.0
      %1379 = vadd.xlane.f32.xlu0 %v1378
      %v1380 = vpop.xlane.xlu0 %1379
      %v1381 = vmul.f32 %v1380, %v539
      %v1382 = vsub.f32 %v1375, %v1381
      %v1383 = vmul.f32 %v1382, %v1382
      %v1384 = vsel %vm535, %v1383, 0.0
      %1385 = vadd.xlane.f32.xlu0 %v1384
      %v1386 = vpop.xlane.xlu0 %1385
      %v1387 = vmul.f32 %v1386, %v539
      %v1388 = vadd.f32 %v1387, 1e-12
      %v1389 = vrsqrt.pop %v1388
      %v1390 = vmul.f32 %v1382, %v1389
      %v1392 = vlaneseq
      %v1393 = vshrl.u32 %v1392, 7
      %v1394 = vsub.s32 0, %v1393
      %v1395 = vrot.slane %v1376, %v1394
      %v1397 = vmul.f32 %v1390, %v1395
      %v1399 = vlaneseq
      %v1400 = vshrl.u32 %v1399, 7
      %v1401 = vsub.s32 0, %v1400
      %v1402 = vrot.slane %v1377, %v1401
      %v1404 = vadd.f32 %v1397, %v1402
      %s1405 = scalar_lea.vmem %s4, 32
      %v1406 = vld [vmem:[%s1405] sm:$0xff]
      %v1407 = vld [vmem:[%s1405 + $0x8] sm:$0xff]
      %v1408 = vld [vmem:[%s1405 + $0x10] sm:$0xff]
      %v1409 = vld [vmem:[%s1405 + $0x18] sm:$0xff]
      %s1410 = scalar_lea.vmem %s5, 1
      %v1411 = vld [vmem:[%s1410] sm:$0x1]
      %v1413 = vlaneseq
      %v1414 = vshrl.u32 %v1413, 7
      %v1415 = vsub.s32 0, %v1414
      %v1416 = vrot.slane %v1411, %v1415
      %v1419 = vsel %vm535, %v1404, 0
      %1421 = vmatprep.subr.mxu0 0.0
      %1422 = vmatpush1.msra.mxu0 0.0
      %1423 = vmatprep.subr.mxu0 0.0
      %1424 = vmatpush1.msra.mxu0 0.0
      %1425 = vmatprep.subr.mxu0 0.0
      %1426 = vmatpush1.msra.mxu0 0.0
      %1427 = vmatprep.subr.mxu0 0.0
      %1428 = vmatpush1.msra.mxu0 0.0
      %1429 = vmatprep.subr.mxu0 0.0
      %1430 = vmatpush1.msra.mxu0 0.0
      %1431 = vmatprep.subr.mxu0 0.0
      %1432 = vmatpush1.msra.mxu0 0.0
      %1433 = vmatprep.subr.mxu0 0.0
      %1434 = vmatpush1.msra.mxu0 0.0
      %1435 = vmatprep.subr.mxu0 0.0
      %1436 = vmatpush1.msra.mxu0 0.0
      %1437 = vmatprep.subr.mxu0 0.0
      %1438 = vmatpush1.msra.mxu0 0.0
      %1439 = vmatprep.subr.mxu0 0.0
      %1440 = vmatpush1.msra.mxu0 0.0
      %1441 = vmatprep.subr.mxu0 0.0
      %1442 = vmatpush1.msra.mxu0 0.0
      %1443 = vmatprep.subr.mxu0 0.0
      %1444 = vmatpush1.msra.mxu0 0.0
      %1445 = vmatprep.subr.mxu0 0.0
      %1446 = vmatpush1.msra.mxu0 %v1409
      %1447 = vmatprep.subr.mxu0 0.0
      %1448 = vmatpush1.msra.mxu0 %v1408
      %1449 = vmatprep.subr.mxu0 0.0
      %1450 = vmatpush1.msra.mxu0 %v1407
      %1451 = vmatprep.subr.mxu0 0.0
      %1452 = vmatpush1.msra.mxu0 %v1406
      %1453 = vmatprep.subr.mxu0 0.0
      %1454 = vmatpush2.msra.mxu0 0.0
      %1455 = vmatprep.subr.mxu0 0.0
      %1456 = vmatpush2.msra.mxu0 0.0
      %1457 = vmatprep.subr.mxu0 0.0
      %1458 = vmatpush2.msra.mxu0 0.0
      %1459 = vmatprep.subr.mxu0 0.0
      %1460 = vmatpush2.msra.mxu0 0.0
      %1461 = vmatprep.subr.mxu0 0.0
      %1462 = vmatpush2.msra.mxu0 0.0
      %1463 = vmatprep.subr.mxu0 0.0
      %1464 = vmatpush2.msra.mxu0 0.0
      %1465 = vmatprep.subr.mxu0 0.0
      %1466 = vmatpush2.msra.mxu0 0.0
      %1467 = vmatprep.subr.mxu0 0.0
      %1468 = vmatpush2.msra.mxu0 0.0
      %1469 = vmatprep.subr.mxu0 0.0
      %1470 = vmatpush2.msra.mxu0 0.0
      %1471 = vmatprep.subr.mxu0 0.0
      %1472 = vmatpush2.msra.mxu0 0.0
      %1473 = vmatprep.subr.mxu0 0.0
      %1474 = vmatpush2.msra.mxu0 0.0
      %1475 = vmatprep.subr.mxu0 0.0
      %1476 = vmatpush2.msra.mxu0 0.0
      %1477 = vmatprep.subr.mxu0 0.0
      %1478 = vmatpush2.msra.mxu0 0.0
      %1479 = vmatprep.subr.mxu0 0.0
      %1480 = vmatpush2.msra.mxu0 0.0
      %1481 = vmatprep.subr.mxu0 0.0
      %1482 = vmatpush2.msra.mxu0 0.0
      %1483 = vmatprep.subr.mxu0 0.0
      %1484 = vmatpush2.msra.mxu0 0.0
      %1485 = vmatprep.mubr.f32.mxu0 0.0
      %1486 = vmatmul.mubr.f32.gmra.mxu0 %v1419
      %v1487 = vpop.f32.mrf.mxu0
      %v1488 = vadd.f32 %v1416, %v1487
      %v1489 = vpop.f32.mrf.mxu0
      %1490 = vdwg.mxu0
      %s1491 = scalar_lea.vmem %s6, 32
      %v1492 = vld [vmem:[%s1491] sm:$0xff]
      %v1493 = vld [vmem:[%s1491 + $0x8] sm:$0xff]
      %v1494 = vld [vmem:[%s1491 + $0x10] sm:$0xff]
      %v1495 = vld [vmem:[%s1491 + $0x18] sm:$0xff]
      %v1496 = vmul.f32 %v1488, 0.25
      %1498 = vrot.lane.b32.xlu0 %v1488, 96
      %v1499 = vpop.permute.xlu0 %1498
      %v1501 = vsel %vm662, %v1496, 0
      %v1503 = vsel %vm662, %v1499, 0
      %1505 = vmatprep.subr.mxu0 0.0
      %1506 = vmatpush1.xpose.msra.mxu0 0.0
      %1507 = vmatprep.subr.mxu0 0.0
      %1508 = vmatpush1.xpose.msra.mxu0 0.0
      %1509 = vmatprep.subr.mxu0 0.0
      %1510 = vmatpush1.xpose.msra.mxu0 0.0
      %1511 = vmatprep.subr.mxu0 0.0
      %1512 = vmatpush1.xpose.msra.mxu0 0.0
      %1513 = vmatprep.subr.mxu0 0.0
      %1514 = vmatpush1.xpose.msra.mxu0 0.0
      %1515 = vmatprep.subr.mxu0 0.0
      %1516 = vmatpush1.xpose.msra.mxu0 0.0
      %1517 = vmatprep.subr.mxu0 0.0
      %1518 = vmatpush1.xpose.msra.mxu0 0.0
      %1519 = vmatprep.subr.mxu0 0.0
      %1520 = vmatpush1.xpose.msra.mxu0 0.0
      %1521 = vmatprep.subr.mxu0 0.0
      %1522 = vmatpush1.xpose.msra.mxu0 0.0
      %1523 = vmatprep.subr.mxu0 0.0
      %1524 = vmatpush1.xpose.msra.mxu0 0.0
      %1525 = vmatprep.subr.mxu0 0.0
      %1526 = vmatpush1.xpose.msra.mxu0 0.0
      %1527 = vmatprep.subr.mxu0 0.0
      %1528 = vmatpush1.xpose.msra.mxu0 0.0
      %1529 = vmatprep.subr.mxu0 0.0
      %1530 = vmatpush1.xpose.msra.mxu0 0.0
      %1531 = vmatprep.subr.mxu0 0.0
      %1532 = vmatpush1.xpose.msra.mxu0 0.0
      %1533 = vmatprep.subr.mxu0 0.0
      %1534 = vmatpush1.xpose.msra.mxu0 0.0
      %1535 = vmatprep.subr.mxu0 0.0
      %1536 = vmatpush1.xpose.msra.mxu0 %v1503
      %1537 = vmatprep.subr.mxu0 0.0
      %1538 = vmatpush2.xpose.msra.mxu0 0.0
      %1539 = vmatprep.subr.mxu0 0.0
      %1540 = vmatpush2.xpose.msra.mxu0 0.0
      %1541 = vmatprep.subr.mxu0 0.0
      %1542 = vmatpush2.xpose.msra.mxu0 0.0
      %1543 = vmatprep.subr.mxu0 0.0
      %1544 = vmatpush2.xpose.msra.mxu0 0.0
      %1545 = vmatprep.subr.mxu0 0.0
      %1546 = vmatpush2.xpose.msra.mxu0 0.0
      %1547 = vmatprep.subr.mxu0 0.0
      %1548 = vmatpush2.xpose.msra.mxu0 0.0
      %1549 = vmatprep.subr.mxu0 0.0
      %1550 = vmatpush2.xpose.msra.mxu0 0.0
      %1551 = vmatprep.subr.mxu0 0.0
      %1552 = vmatpush2.xpose.msra.mxu0 0.0
      %1553 = vmatprep.subr.mxu0 0.0
      %1554 = vmatpush2.xpose.msra.mxu0 0.0
      %1555 = vmatprep.subr.mxu0 0.0
      %1556 = vmatpush2.xpose.msra.mxu0 0.0
      %1557 = vmatprep.subr.mxu0 0.0
      %1558 = vmatpush2.xpose.msra.mxu0 0.0
      %1559 = vmatprep.subr.mxu0 0.0
      %1560 = vmatpush2.xpose.msra.mxu0 0.0
      %1561 = vmatprep.subr.mxu0 0.0
      %1562 = vmatpush2.xpose.msra.mxu0 0.0
      %1563 = vmatprep.subr.mxu0 0.0
      %1564 = vmatpush2.xpose.msra.mxu0 0.0
      %1565 = vmatprep.subr.mxu0 0.0
      %1566 = vmatpush2.xpose.msra.mxu0 0.0
      %1567 = vmatprep.subr.mxu0 0.0
      %1568 = vmatpush2.xpose.msra.mxu0 0.0
      %1569 = vmatprep.mubr.f32.mxu0 0.0
      %1570 = vmatmul.mubr.f32.gmra.mxu0 %v1501
      %v1571 = vpop.f32.mrf.mxu0
      %v1572 = vadd.f32 %v657, %v1571
      %v1573 = vpop.f32.mrf.mxu0
      %1574 = vdwg.mxu0
      %v1575 = vsel %vm738, %v1572, -inf
      %1576 = vmax.xlane.f32.xlu0 %v1575
      %v1577 = vpop.xlane.xlu0 %1576
      %v1578 = vsub.f32 %v1572, %v1577
      %v1579 = vmul.f32 %v1578, 1.442695
      %v1580 = vpow.pop %v1579
      %v1581 = vsel %vm738, %v1580, 0.0
      %1582 = vadd.xlane.f32.xlu0 %v1581
      %v1583 = vpop.xlane.xlu0 %1582
      %v1584 = vrcp.pop %v1583
      %v1585 = vmul.f32 %v1580, %v1584
      %1586 = vrot.lane.b32.xlu0 %v1488, 64
      %v1587 = vpop.permute.xlu0 %1586
      %v1590 = vsel %vm738, %v1585, 0
      %1592 = vmatprep.subr.mxu0 0.0
      %1593 = vmatpush1.msra.mxu0 0.0
      %1594 = vmatprep.subr.mxu0 0.0
      %1595 = vmatpush1.msra.mxu0 0.0
      %1596 = vmatprep.subr.mxu0 0.0
      %1597 = vmatpush1.msra.mxu0 0.0
      %1598 = vmatprep.subr.mxu0 0.0
      %1599 = vmatpush1.msra.mxu0 0.0
      %1600 = vmatprep.subr.mxu0 0.0
      %1601 = vmatpush1.msra.mxu0 0.0
      %1602 = vmatprep.subr.mxu0 0.0
      %1603 = vmatpush1.msra.mxu0 0.0
      %1604 = vmatprep.subr.mxu0 0.0
      %1605 = vmatpush1.msra.mxu0 0.0
      %1606 = vmatprep.subr.mxu0 0.0
      %1607 = vmatpush1.msra.mxu0 0.0
      %1608 = vmatprep.subr.mxu0 0.0
      %1609 = vmatpush1.msra.mxu0 0.0
      %1610 = vmatprep.subr.mxu0 0.0
      %1611 = vmatpush1.msra.mxu0 0.0
      %1612 = vmatprep.subr.mxu0 0.0
      %1613 = vmatpush1.msra.mxu0 0.0
      %1614 = vmatprep.subr.mxu0 0.0
      %1615 = vmatpush1.msra.mxu0 0.0
      %1616 = vmatprep.subr.mxu0 0.0
      %1617 = vmatpush1.msra.mxu0 0.0
      %1618 = vmatprep.subr.mxu0 0.0
      %1619 = vmatpush1.msra.mxu0 0.0
      %1620 = vmatprep.subr.mxu0 0.0
      %1621 = vmatpush1.msra.mxu0 0.0
      %1622 = vmatprep.subr.mxu0 0.0
      %1623 = vmatpush1.msra.mxu0 %v1587
      %1624 = vmatprep.subr.mxu0 0.0
      %1625 = vmatpush2.msra.mxu0 0.0
      %1626 = vmatprep.subr.mxu0 0.0
      %1627 = vmatpush2.msra.mxu0 0.0
      %1628 = vmatprep.subr.mxu0 0.0
      %1629 = vmatpush2.msra.mxu0 0.0
      %1630 = vmatprep.subr.mxu0 0.0
      %1631 = vmatpush2.msra.mxu0 0.0
      %1632 = vmatprep.subr.mxu0 0.0
      %1633 = vmatpush2.msra.mxu0 0.0
      %1634 = vmatprep.subr.mxu0 0.0
      %1635 = vmatpush2.msra.mxu0 0.0
      %1636 = vmatprep.subr.mxu0 0.0
      %1637 = vmatpush2.msra.mxu0 0.0
      %1638 = vmatprep.subr.mxu0 0.0
      %1639 = vmatpush2.msra.mxu0 0.0
      %1640 = vmatprep.subr.mxu0 0.0
      %1641 = vmatpush2.msra.mxu0 0.0
      %1642 = vmatprep.subr.mxu0 0.0
      %1643 = vmatpush2.msra.mxu0 0.0
      %1644 = vmatprep.subr.mxu0 0.0
      %1645 = vmatpush2.msra.mxu0 0.0
      %1646 = vmatprep.subr.mxu0 0.0
      %1647 = vmatpush2.msra.mxu0 0.0
      %1648 = vmatprep.subr.mxu0 0.0
      %1649 = vmatpush2.msra.mxu0 0.0
      %1650 = vmatprep.subr.mxu0 0.0
      %1651 = vmatpush2.msra.mxu0 0.0
      %1652 = vmatprep.subr.mxu0 0.0
      %1653 = vmatpush2.msra.mxu0 0.0
      %1654 = vmatprep.subr.mxu0 0.0
      %1655 = vmatpush2.msra.mxu0 0.0
      %1656 = vmatprep.mubr.f32.mxu0 0.0
      %1657 = vmatmul.mubr.f32.gmra.mxu0 %v1590
      %v1658 = vpop.f32.mrf.mxu0
      %v1659 = vadd.f32 0.0, %v1658
      %v1660 = vpop.f32.mrf.mxu0
      %1661 = vdwg.mxu0
      %1662 = vrot.lane.b32.xlu0 %v1496, 112
      %v1663 = vpop.permute.xlu0 %1662
      %1664 = vrot.lane.b32.xlu0 %v1488, 80
      %v1665 = vpop.permute.xlu0 %1664
      %v1666 = vsel %vm662, %v1663, 0
      %v1668 = vsel %vm662, %v1665, 0
      %1670 = vmatprep.subr.mxu0 0.0
      %1671 = vmatpush1.xpose.msra.mxu0 0.0
      %1672 = vmatprep.subr.mxu0 0.0
      %1673 = vmatpush1.xpose.msra.mxu0 0.0
      %1674 = vmatprep.subr.mxu0 0.0
      %1675 = vmatpush1.xpose.msra.mxu0 0.0
      %1676 = vmatprep.subr.mxu0 0.0
      %1677 = vmatpush1.xpose.msra.mxu0 0.0
      %1678 = vmatprep.subr.mxu0 0.0
      %1679 = vmatpush1.xpose.msra.mxu0 0.0
      %1680 = vmatprep.subr.mxu0 0.0
      %1681 = vmatpush1.xpose.msra.mxu0 0.0
      %1682 = vmatprep.subr.mxu0 0.0
      %1683 = vmatpush1.xpose.msra.mxu0 0.0
      %1684 = vmatprep.subr.mxu0 0.0
      %1685 = vmatpush1.xpose.msra.mxu0 0.0
      %1686 = vmatprep.subr.mxu0 0.0
      %1687 = vmatpush1.xpose.msra.mxu0 0.0
      %1688 = vmatprep.subr.mxu0 0.0
      %1689 = vmatpush1.xpose.msra.mxu0 0.0
      %1690 = vmatprep.subr.mxu0 0.0
      %1691 = vmatpush1.xpose.msra.mxu0 0.0
      %1692 = vmatprep.subr.mxu0 0.0
      %1693 = vmatpush1.xpose.msra.mxu0 0.0
      %1694 = vmatprep.subr.mxu0 0.0
      %1695 = vmatpush1.xpose.msra.mxu0 0.0
      %1696 = vmatprep.subr.mxu0 0.0
      %1697 = vmatpush1.xpose.msra.mxu0 0.0
      %1698 = vmatprep.subr.mxu0 0.0
      %1699 = vmatpush1.xpose.msra.mxu0 0.0
      %1700 = vmatprep.subr.mxu0 0.0
      %1701 = vmatpush1.xpose.msra.mxu0 %v1668
      %1702 = vmatprep.subr.mxu0 0.0
      %1703 = vmatpush2.xpose.msra.mxu0 0.0
      %1704 = vmatprep.subr.mxu0 0.0
      %1705 = vmatpush2.xpose.msra.mxu0 0.0
      %1706 = vmatprep.subr.mxu0 0.0
      %1707 = vmatpush2.xpose.msra.mxu0 0.0
      %1708 = vmatprep.subr.mxu0 0.0
      %1709 = vmatpush2.xpose.msra.mxu0 0.0
      %1710 = vmatprep.subr.mxu0 0.0
      %1711 = vmatpush2.xpose.msra.mxu0 0.0
      %1712 = vmatprep.subr.mxu0 0.0
      %1713 = vmatpush2.xpose.msra.mxu0 0.0
      %1714 = vmatprep.subr.mxu0 0.0
      %1715 = vmatpush2.xpose.msra.mxu0 0.0
      %1716 = vmatprep.subr.mxu0 0.0
      %1717 = vmatpush2.xpose.msra.mxu0 0.0
      %1718 = vmatprep.subr.mxu0 0.0
      %1719 = vmatpush2.xpose.msra.mxu0 0.0
      %1720 = vmatprep.subr.mxu0 0.0
      %1721 = vmatpush2.xpose.msra.mxu0 0.0
      %1722 = vmatprep.subr.mxu0 0.0
      %1723 = vmatpush2.xpose.msra.mxu0 0.0
      %1724 = vmatprep.subr.mxu0 0.0
      %1725 = vmatpush2.xpose.msra.mxu0 0.0
      %1726 = vmatprep.subr.mxu0 0.0
      %1727 = vmatpush2.xpose.msra.mxu0 0.0
      %1728 = vmatprep.subr.mxu0 0.0
      %1729 = vmatpush2.xpose.msra.mxu0 0.0
      %1730 = vmatprep.subr.mxu0 0.0
      %1731 = vmatpush2.xpose.msra.mxu0 0.0
      %1732 = vmatprep.subr.mxu0 0.0
      %1733 = vmatpush2.xpose.msra.mxu0 0.0
      %1734 = vmatprep.mubr.f32.mxu0 0.0
      %1735 = vmatmul.mubr.f32.gmra.mxu0 %v1666
      %v1736 = vpop.f32.mrf.mxu0
      %v1737 = vadd.f32 %v657, %v1736
      %v1738 = vpop.f32.mrf.mxu0
      %1739 = vdwg.mxu0
      %v1740 = vsel %vm738, %v1737, -inf
      %1741 = vmax.xlane.f32.xlu0 %v1740
      %v1742 = vpop.xlane.xlu0 %1741
      %v1743 = vsub.f32 %v1737, %v1742
      %v1744 = vmul.f32 %v1743, 1.442695
      %v1745 = vpow.pop %v1744
      %v1746 = vsel %vm738, %v1745, 0.0
      %1747 = vadd.xlane.f32.xlu0 %v1746
      %v1748 = vpop.xlane.xlu0 %1747
      %v1749 = vrcp.pop %v1748
      %v1750 = vmul.f32 %v1745, %v1749
      %1751 = vrot.lane.b32.xlu0 %v1488, 48
      %v1752 = vpop.permute.xlu0 %1751
      %v1755 = vsel %vm738, %v1750, 0
      %1757 = vmatprep.subr.mxu0 0.0
      %1758 = vmatpush1.msra.mxu0 0.0
      %1759 = vmatprep.subr.mxu0 0.0
      %1760 = vmatpush1.msra.mxu0 0.0
      %1761 = vmatprep.subr.mxu0 0.0
      %1762 = vmatpush1.msra.mxu0 0.0
      %1763 = vmatprep.subr.mxu0 0.0
      %1764 = vmatpush1.msra.mxu0 0.0
      %1765 = vmatprep.subr.mxu0 0.0
      %1766 = vmatpush1.msra.mxu0 0.0
      %1767 = vmatprep.subr.mxu0 0.0
      %1768 = vmatpush1.msra.mxu0 0.0
      %1769 = vmatprep.subr.mxu0 0.0
      %1770 = vmatpush1.msra.mxu0 0.0
      %1771 = vmatprep.subr.mxu0 0.0
      %1772 = vmatpush1.msra.mxu0 0.0
      %1773 = vmatprep.subr.mxu0 0.0
      %1774 = vmatpush1.msra.mxu0 0.0
      %1775 = vmatprep.subr.mxu0 0.0
      %1776 = vmatpush1.msra.mxu0 0.0
      %1777 = vmatprep.subr.mxu0 0.0
      %1778 = vmatpush1.msra.mxu0 0.0
      %1779 = vmatprep.subr.mxu0 0.0
      %1780 = vmatpush1.msra.mxu0 0.0
      %1781 = vmatprep.subr.mxu0 0.0
      %1782 = vmatpush1.msra.mxu0 0.0
      %1783 = vmatprep.subr.mxu0 0.0
      %1784 = vmatpush1.msra.mxu0 0.0
      %1785 = vmatprep.subr.mxu0 0.0
      %1786 = vmatpush1.msra.mxu0 0.0
      %1787 = vmatprep.subr.mxu0 0.0
      %1788 = vmatpush1.msra.mxu0 %v1752
      %1789 = vmatprep.subr.mxu0 0.0
      %1790 = vmatpush2.msra.mxu0 0.0
      %1791 = vmatprep.subr.mxu0 0.0
      %1792 = vmatpush2.msra.mxu0 0.0
      %1793 = vmatprep.subr.mxu0 0.0
      %1794 = vmatpush2.msra.mxu0 0.0
      %1795 = vmatprep.subr.mxu0 0.0
      %1796 = vmatpush2.msra.mxu0 0.0
      %1797 = vmatprep.subr.mxu0 0.0
      %1798 = vmatpush2.msra.mxu0 0.0
      %1799 = vmatprep.subr.mxu0 0.0
      %1800 = vmatpush2.msra.mxu0 0.0
      %1801 = vmatprep.subr.mxu0 0.0
      %1802 = vmatpush2.msra.mxu0 0.0
      %1803 = vmatprep.subr.mxu0 0.0
      %1804 = vmatpush2.msra.mxu0 0.0
      %1805 = vmatprep.subr.mxu0 0.0
      %1806 = vmatpush2.msra.mxu0 0.0
      %1807 = vmatprep.subr.mxu0 0.0
      %1808 = vmatpush2.msra.mxu0 0.0
      %1809 = vmatprep.subr.mxu0 0.0
      %1810 = vmatpush2.msra.mxu0 0.0
      %1811 = vmatprep.subr.mxu0 0.0
      %1812 = vmatpush2.msra.mxu0 0.0
      %1813 = vmatprep.subr.mxu0 0.0
      %1814 = vmatpush2.msra.mxu0 0.0
      %1815 = vmatprep.subr.mxu0 0.0
      %1816 = vmatpush2.msra.mxu0 0.0
      %1817 = vmatprep.subr.mxu0 0.0
      %1818 = vmatpush2.msra.mxu0 0.0
      %1819 = vmatprep.subr.mxu0 0.0
      %1820 = vmatpush2.msra.mxu0 0.0
      %1821 = vmatprep.mubr.f32.mxu0 0.0
      %1822 = vmatmul.mubr.f32.gmra.mxu0 %v1755
      %v1823 = vpop.f32.mrf.mxu0
      %v1824 = vadd.f32 0.0, %v1823
      %v1825 = vpop.f32.mrf.mxu0
      %1826 = vdwg.mxu0
      %v1828 = vsel %vm662, %v1824, 0
      %1830 = vmatprep.subr.mxu0 0.0
      %1831 = vmatpush1.msra.mxu0 0.0
      %1832 = vmatprep.subr.mxu0 0.0
      %1833 = vmatpush1.msra.mxu0 0.0
      %1834 = vmatprep.subr.mxu0 0.0
      %1835 = vmatpush1.msra.mxu0 0.0
      %1836 = vmatprep.subr.mxu0 0.0
      %1837 = vmatpush1.msra.mxu0 0.0
      %1838 = vmatprep.subr.mxu0 0.0
      %1839 = vmatpush1.msra.mxu0 0.0
      %1840 = vmatprep.subr.mxu0 0.0
      %1841 = vmatpush1.msra.mxu0 0.0
      %1842 = vmatprep.subr.mxu0 0.0
      %1843 = vmatpush1.msra.mxu0 0.0
      %1844 = vmatprep.subr.mxu0 0.0
      %1845 = vmatpush1.msra.mxu0 0.0
      %1846 = vmatprep.subr.mxu0 0.0
      %1847 = vmatpush1.msra.mxu0 0.0
      %1848 = vmatprep.subr.mxu0 0.0
      %1849 = vmatpush1.msra.mxu0 0.0
      %1850 = vmatprep.subr.mxu0 0.0
      %1851 = vmatpush1.msra.mxu0 0.0
      %1852 = vmatprep.subr.mxu0 0.0
      %1853 = vmatpush1.msra.mxu0 0.0
      %1854 = vmatprep.subr.mxu0 0.0
      %1855 = vmatpush1.msra.mxu0 0.0
      %1856 = vmatprep.subr.mxu0 0.0
      %1857 = vmatpush1.msra.mxu0 0.0
      %1858 = vmatprep.subr.mxu0 0.0
      %1859 = vmatpush1.msra.mxu0 %v1495
      %1860 = vmatprep.subr.mxu0 0.0
      %1861 = vmatpush1.msra.mxu0 %v1494
      %1862 = vmatprep.subr.mxu0 0.0
      %1863 = vmatpush2.msra.mxu0 0.0
      %1864 = vmatprep.subr.mxu0 0.0
      %1865 = vmatpush2.msra.mxu0 0.0
      %1866 = vmatprep.subr.mxu0 0.0
      %1867 = vmatpush2.msra.mxu0 0.0
      %1868 = vmatprep.subr.mxu0 0.0
      %1869 = vmatpush2.msra.mxu0 0.0
      %1870 = vmatprep.subr.mxu0 0.0
      %1871 = vmatpush2.msra.mxu0 0.0
      %1872 = vmatprep.subr.mxu0 0.0
      %1873 = vmatpush2.msra.mxu0 0.0
      %1874 = vmatprep.subr.mxu0 0.0
      %1875 = vmatpush2.msra.mxu0 0.0
      %1876 = vmatprep.subr.mxu0 0.0
      %1877 = vmatpush2.msra.mxu0 0.0
      %1878 = vmatprep.subr.mxu0 0.0
      %1879 = vmatpush2.msra.mxu0 0.0
      %1880 = vmatprep.subr.mxu0 0.0
      %1881 = vmatpush2.msra.mxu0 0.0
      %1882 = vmatprep.subr.mxu0 0.0
      %1883 = vmatpush2.msra.mxu0 0.0
      %1884 = vmatprep.subr.mxu0 0.0
      %1885 = vmatpush2.msra.mxu0 0.0
      %1886 = vmatprep.subr.mxu0 0.0
      %1887 = vmatpush2.msra.mxu0 0.0
      %1888 = vmatprep.subr.mxu0 0.0
      %1889 = vmatpush2.msra.mxu0 0.0
      %1890 = vmatprep.subr.mxu0 0.0
      %1891 = vmatpush2.msra.mxu0 0.0
      %1892 = vmatprep.subr.mxu0 0.0
      %1893 = vmatpush2.msra.mxu0 0.0
      %1894 = vmatprep.mubr.f32.mxu0 0.0
      %1895 = vmatmul.mubr.f32.gmra.mxu0 %v1828
      %v1896 = vpop.f32.mrf.mxu0
      %v1897 = vadd.f32 0.0, %v1896
      %v1898 = vpop.f32.mrf.mxu0
      %1899 = vdwg.mxu0
      %v1901 = vsel %vm662, %v1659, 0
      %1903 = vmatprep.subr.mxu0 0.0
      %1904 = vmatpush1.msra.mxu0 0.0
      %1905 = vmatprep.subr.mxu0 0.0
      %1906 = vmatpush1.msra.mxu0 0.0
      %1907 = vmatprep.subr.mxu0 0.0
      %1908 = vmatpush1.msra.mxu0 0.0
      %1909 = vmatprep.subr.mxu0 0.0
      %1910 = vmatpush1.msra.mxu0 0.0
      %1911 = vmatprep.subr.mxu0 0.0
      %1912 = vmatpush1.msra.mxu0 0.0
      %1913 = vmatprep.subr.mxu0 0.0
      %1914 = vmatpush1.msra.mxu0 0.0
      %1915 = vmatprep.subr.mxu0 0.0
      %1916 = vmatpush1.msra.mxu0 0.0
      %1917 = vmatprep.subr.mxu0 0.0
      %1918 = vmatpush1.msra.mxu0 0.0
      %1919 = vmatprep.subr.mxu0 0.0
      %1920 = vmatpush1.msra.mxu0 0.0
      %1921 = vmatprep.subr.mxu0 0.0
      %1922 = vmatpush1.msra.mxu0 0.0
      %1923 = vmatprep.subr.mxu0 0.0
      %1924 = vmatpush1.msra.mxu0 0.0
      %1925 = vmatprep.subr.mxu0 0.0
      %1926 = vmatpush1.msra.mxu0 0.0
      %1927 = vmatprep.subr.mxu0 0.0
      %1928 = vmatpush1.msra.mxu0 0.0
      %1929 = vmatprep.subr.mxu0 0.0
      %1930 = vmatpush1.msra.mxu0 0.0
      %1931 = vmatprep.subr.mxu0 0.0
      %1932 = vmatpush1.msra.mxu0 %v1493
      %1933 = vmatprep.subr.mxu0 0.0
      %1934 = vmatpush1.msra.mxu0 %v1492
      %1935 = vmatprep.subr.mxu0 0.0
      %1936 = vmatpush2.msra.mxu0 0.0
      %1937 = vmatprep.subr.mxu0 0.0
      %1938 = vmatpush2.msra.mxu0 0.0
      %1939 = vmatprep.subr.mxu0 0.0
      %1940 = vmatpush2.msra.mxu0 0.0
      %1941 = vmatprep.subr.mxu0 0.0
      %1942 = vmatpush2.msra.mxu0 0.0
      %1943 = vmatprep.subr.mxu0 0.0
      %1944 = vmatpush2.msra.mxu0 0.0
      %1945 = vmatprep.subr.mxu0 0.0
      %1946 = vmatpush2.msra.mxu0 0.0
      %1947 = vmatprep.subr.mxu0 0.0
      %1948 = vmatpush2.msra.mxu0 0.0
      %1949 = vmatprep.subr.mxu0 0.0
      %1950 = vmatpush2.msra.mxu0 0.0
      %1951 = vmatprep.subr.mxu0 0.0
      %1952 = vmatpush2.msra.mxu0 0.0
      %1953 = vmatprep.subr.mxu0 0.0
      %1954 = vmatpush2.msra.mxu0 0.0
      %1955 = vmatprep.subr.mxu0 0.0
      %1956 = vmatpush2.msra.mxu0 0.0
      %1957 = vmatprep.subr.mxu0 0.0
      %1958 = vmatpush2.msra.mxu0 0.0
      %1959 = vmatprep.subr.mxu0 0.0
      %1960 = vmatpush2.msra.mxu0 0.0
      %1961 = vmatprep.subr.mxu0 0.0
      %1962 = vmatpush2.msra.mxu0 0.0
      %1963 = vmatprep.subr.mxu0 0.0
      %1964 = vmatpush2.msra.mxu0 0.0
      %1965 = vmatprep.subr.mxu0 0.0
      %1966 = vmatpush2.msra.mxu0 0.0
      %1967 = vmatprep.mubr.f32.mxu0 0.0
      %1968 = vmatmul.mubr.f32.gmra.mxu0 %v1901
      %v1969 = vpop.f32.mrf.mxu0
      %v1970 = vadd.f32 %v1897, %v1969
      %v1971 = vpop.f32.mrf.mxu0
      %1972 = vdwg.mxu0
      %s1973 = scalar_lea.vmem %s7, 1
      %v1974 = vld [vmem:[%s1973] sm:$0x1]
      %v1976 = vlaneseq
      %v1977 = vshrl.u32 %v1976, 7
      %v1978 = vsub.s32 0, %v1977
      %v1979 = vrot.slane %v1974, %v1978
      %v1981 = vadd.f32 %v1970, %v1979
      %v1982 = vadd.f32 %v1981, %v1404
      %s1983 = scalar_lea.vmem %s8, 1
      %v1984 = vld [vmem:[%s1983] sm:$0x1]
      %s1985 = scalar_lea.vmem %s9, 1
      %v1986 = vld [vmem:[%s1985] sm:$0x1]
      %v1987 = vsel %vm535, %v1982, 0.0
      %1988 = vadd.xlane.f32.xlu0 %v1987
      %v1989 = vpop.xlane.xlu0 %1988
      %v1990 = vmul.f32 %v1989, %v539
      %v1991 = vsub.f32 %v1982, %v1990
      %v1992 = vmul.f32 %v1991, %v1991
      %v1993 = vsel %vm535, %v1992, 0.0
      %1994 = vadd.xlane.f32.xlu0 %v1993
      %v1995 = vpop.xlane.xlu0 %1994
      %v1996 = vmul.f32 %v1995, %v539
      %v1997 = vadd.f32 %v1996, 1e-12
      %v1998 = vrsqrt.pop %v1997
      %v1999 = vmul.f32 %v1991, %v1998
      %v2001 = vlaneseq
      %v2002 = vshrl.u32 %v2001, 7
      %v2003 = vsub.s32 0, %v2002
      %v2004 = vrot.slane %v1984, %v2003
      %v2006 = vmul.f32 %v1999, %v2004
      %v2008 = vlaneseq
      %v2009 = vshrl.u32 %v2008, 7
      %v2010 = vsub.s32 0, %v2009
      %v2011 = vrot.slane %v1986, %v2010
      %v2013 = vadd.f32 %v2006, %v2011
      %s2014 = scalar_lea.vmem %s10, 32
      %v2015 = vld [vmem:[%s2014] sm:$0xff]
      %v2016 = vld [vmem:[%s2014 + $0x8] sm:$0xff]
      %v2017 = vld [vmem:[%s2014 + $0x10] sm:$0xff]
      %v2018 = vld [vmem:[%s2014 + $0x18] sm:$0xff]
      %s2019 = scalar_lea.vmem %s11, 1
      %v2020 = vld [vmem:[%s2019] sm:$0x1]
      %v2022 = vlaneseq
      %v2023 = vshrl.u32 %v2022, 7
      %v2024 = vsub.s32 0, %v2023
      %v2025 = vrot.slane %v2020, %v2024
      %v2028 = vsel %vm535, %v2013, 0
      %2030 = vmatprep.subr.mxu0 0.0
      %2031 = vmatpush1.msra.mxu0 0.0
      %2032 = vmatprep.subr.mxu0 0.0
      %2033 = vmatpush1.msra.mxu0 0.0
      %2034 = vmatprep.subr.mxu0 0.0
      %2035 = vmatpush1.msra.mxu0 0.0
      %2036 = vmatprep.subr.mxu0 0.0
      %2037 = vmatpush1.msra.mxu0 0.0
      %2038 = vmatprep.subr.mxu0 0.0
      %2039 = vmatpush1.msra.mxu0 0.0
      %2040 = vmatprep.subr.mxu0 0.0
      %2041 = vmatpush1.msra.mxu0 0.0
      %2042 = vmatprep.subr.mxu0 0.0
      %2043 = vmatpush1.msra.mxu0 0.0
      %2044 = vmatprep.subr.mxu0 0.0
      %2045 = vmatpush1.msra.mxu0 0.0
      %2046 = vmatprep.subr.mxu0 0.0
      %2047 = vmatpush1.msra.mxu0 0.0
      %2048 = vmatprep.subr.mxu0 0.0
      %2049 = vmatpush1.msra.mxu0 0.0
      %2050 = vmatprep.subr.mxu0 0.0
      %2051 = vmatpush1.msra.mxu0 0.0
      %2052 = vmatprep.subr.mxu0 0.0
      %2053 = vmatpush1.msra.mxu0 0.0
      %2054 = vmatprep.subr.mxu0 0.0
      %2055 = vmatpush1.msra.mxu0 %v2018
      %2056 = vmatprep.subr.mxu0 0.0
      %2057 = vmatpush1.msra.mxu0 %v2017
      %2058 = vmatprep.subr.mxu0 0.0
      %2059 = vmatpush1.msra.mxu0 %v2016
      %2060 = vmatprep.subr.mxu0 0.0
      %2061 = vmatpush1.msra.mxu0 %v2015
      %2062 = vmatprep.subr.mxu0 0.0
      %2063 = vmatpush2.msra.mxu0 0.0
      %2064 = vmatprep.subr.mxu0 0.0
      %2065 = vmatpush2.msra.mxu0 0.0
      %2066 = vmatprep.subr.mxu0 0.0
      %2067 = vmatpush2.msra.mxu0 0.0
      %2068 = vmatprep.subr.mxu0 0.0
      %2069 = vmatpush2.msra.mxu0 0.0
      %2070 = vmatprep.subr.mxu0 0.0
      %2071 = vmatpush2.msra.mxu0 0.0
      %2072 = vmatprep.subr.mxu0 0.0
      %2073 = vmatpush2.msra.mxu0 0.0
      %2074 = vmatprep.subr.mxu0 0.0
      %2075 = vmatpush2.msra.mxu0 0.0
      %2076 = vmatprep.subr.mxu0 0.0
      %2077 = vmatpush2.msra.mxu0 0.0
      %2078 = vmatprep.subr.mxu0 0.0
      %2079 = vmatpush2.msra.mxu0 0.0
      %2080 = vmatprep.subr.mxu0 0.0
      %2081 = vmatpush2.msra.mxu0 0.0
      %2082 = vmatprep.subr.mxu0 0.0
      %2083 = vmatpush2.msra.mxu0 0.0
      %2084 = vmatprep.subr.mxu0 0.0
      %2085 = vmatpush2.msra.mxu0 0.0
      %2086 = vmatprep.subr.mxu0 0.0
      %2087 = vmatpush2.msra.mxu0 0.0
      %2088 = vmatprep.subr.mxu0 0.0
      %2089 = vmatpush2.msra.mxu0 0.0
      %2090 = vmatprep.subr.mxu0 0.0
      %2091 = vmatpush2.msra.mxu0 0.0
      %2092 = vmatprep.subr.mxu0 0.0
      %2093 = vmatpush2.msra.mxu0 0.0
      %2094 = vmatprep.mubr.f32.mxu0 0.0
      %2095 = vmatmul.mubr.f32.gmra.mxu0 %v2028
      %v2096 = vpop.f32.mrf.mxu0
      %v2097 = vadd.f32 %v2025, %v2096
      %v2098 = vpop.f32.mrf.mxu0
      %2099 = vdwg.mxu0
      %v2100 = vmul.f32 %v2097, 0.5
      %v2101 = vmul.f32 %v2097, 0.70710677
      %v2102 = vand.u32 2147483647, %v2101
      %v2103 = vmul.f32 %v2102, 0.3275911
      %v2104 = vadd.f32 %v2103, 1.0
      %v2105 = vrcp.pop %v2104
      %v2106 = vmul.f32 1.0, %v2105
      %v2107 = vmul.f32 %v2106, 1.0614054
      %v2108 = vadd.f32 %v2107, -1.4531521
      %v2109 = vmul.f32 %v2108, %v2106
      %v2110 = vadd.f32 %v2109, 1.4214138
      %v2111 = vmul.f32 %v2110, %v2106
      %v2112 = vadd.f32 %v2111, -0.28449672
      %v2113 = vmul.f32 %v2112, %v2106
      %v2114 = vadd.f32 %v2113, 0.2548296
      %v2115 = vmul.f32 %v2114, %v2106
      %v2116 = vsub.f32 0.0, %v2102
      %v2117 = vmul.f32 %v2116, %v2102
      %v2118 = vmul.f32 %v2117, 1.442695
      %v2119 = vpow.pop %v2118
      %v2120 = vmul.f32 %v2115, %v2119
      %v2121 = vsub.f32 1.0, %v2120
      %vm2122 = vcmp.lt.f32.partialorder %v2101, 0.0
      %v2123 = vsub.f32 0.0, %v2121
      %v2124 = vsel %vm2122, %v2123, %v2121
      %v2125 = vadd.f32 %v2124, 1.0
      %v2126 = vmul.f32 %v2100, %v2125
      %s2127 = scalar_lea.vmem %s12, 64
      %v2128 = vld [vmem:[%s2127] sm:$0xff]
      %v2129 = vld [vmem:[%s2127 + $0x8] sm:$0xff]
      %v2130 = vld [vmem:[%s2127 + $0x10] sm:$0xff]
      %v2131 = vld [vmem:[%s2127 + $0x18] sm:$0xff]
      %v2132 = vld [vmem:[%s2127 + $0x20] sm:$0xff]
      %v2133 = vld [vmem:[%s2127 + $0x28] sm:$0xff]
      %v2134 = vld [vmem:[%s2127 + $0x30] sm:$0xff]
      %v2135 = vld [vmem:[%s2127 + $0x38] sm:$0xff]
      %s2136 = scalar_lea.vmem %s13, 1
      %v2137 = vld [vmem:[%s2136] sm:$0x1]
      %v2139 = vlaneseq
      %v2140 = vshrl.u32 %v2139, 7
      %v2141 = vsub.s32 0, %v2140
      %v2142 = vrot.slane %v2137, %v2141
      %v2145 = vsel %vm1301, %v2126, 0
      %2147 = vmatprep.subr.mxu0 0.0
      %2148 = vmatpush1.msra.mxu0 0.0
      %2149 = vmatprep.subr.mxu0 0.0
      %2150 = vmatpush1.msra.mxu0 0.0
      %2151 = vmatprep.subr.mxu0 0.0
      %2152 = vmatpush1.msra.mxu0 0.0
      %2153 = vmatprep.subr.mxu0 0.0
      %2154 = vmatpush1.msra.mxu0 0.0
      %2155 = vmatprep.subr.mxu0 0.0
      %2156 = vmatpush1.msra.mxu0 0.0
      %2157 = vmatprep.subr.mxu0 0.0
      %2158 = vmatpush1.msra.mxu0 0.0
      %2159 = vmatprep.subr.mxu0 0.0
      %2160 = vmatpush1.msra.mxu0 0.0
      %2161 = vmatprep.subr.mxu0 0.0
      %2162 = vmatpush1.msra.mxu0 0.0
      %2163 = vmatprep.subr.mxu0 0.0
      %2164 = vmatpush1.msra.mxu0 %v2135
      %2165 = vmatprep.subr.mxu0 0.0
      %2166 = vmatpush1.msra.mxu0 %v2134
      %2167 = vmatprep.subr.mxu0 0.0
      %2168 = vmatpush1.msra.mxu0 %v2133
      %2169 = vmatprep.subr.mxu0 0.0
      %2170 = vmatpush1.msra.mxu0 %v2132
      %2171 = vmatprep.subr.mxu0 0.0
      %2172 = vmatpush1.msra.mxu0 %v2131
      %2173 = vmatprep.subr.mxu0 0.0
      %2174 = vmatpush1.msra.mxu0 %v2130
      %2175 = vmatprep.subr.mxu0 0.0
      %2176 = vmatpush1.msra.mxu0 %v2129
      %2177 = vmatprep.subr.mxu0 0.0
      %2178 = vmatpush1.msra.mxu0 %v2128
      %2179 = vmatprep.subr.mxu0 0.0
      %2180 = vmatpush2.msra.mxu0 0.0
      %2181 = vmatprep.subr.mxu0 0.0
      %2182 = vmatpush2.msra.mxu0 0.0
      %2183 = vmatprep.subr.mxu0 0.0
      %2184 = vmatpush2.msra.mxu0 0.0
      %2185 = vmatprep.subr.mxu0 0.0
      %2186 = vmatpush2.msra.mxu0 0.0
      %2187 = vmatprep.subr.mxu0 0.0
      %2188 = vmatpush2.msra.mxu0 0.0
      %2189 = vmatprep.subr.mxu0 0.0
      %2190 = vmatpush2.msra.mxu0 0.0
      %2191 = vmatprep.subr.mxu0 0.0
      %2192 = vmatpush2.msra.mxu0 0.0
      %2193 = vmatprep.subr.mxu0 0.0
      %2194 = vmatpush2.msra.mxu0 0.0
      %2195 = vmatprep.subr.mxu0 0.0
      %2196 = vmatpush2.msra.mxu0 0.0
      %2197 = vmatprep.subr.mxu0 0.0
      %2198 = vmatpush2.msra.mxu0 0.0
      %2199 = vmatprep.subr.mxu0 0.0
      %2200 = vmatpush2.msra.mxu0 0.0
      %2201 = vmatprep.subr.mxu0 0.0
      %2202 = vmatpush2.msra.mxu0 0.0
      %2203 = vmatprep.subr.mxu0 0.0
      %2204 = vmatpush2.msra.mxu0 0.0
      %2205 = vmatprep.subr.mxu0 0.0
      %2206 = vmatpush2.msra.mxu0 0.0
      %2207 = vmatprep.subr.mxu0 0.0
      %2208 = vmatpush2.msra.mxu0 0.0
      %2209 = vmatprep.subr.mxu0 0.0
      %2210 = vmatpush2.msra.mxu0 0.0
      %2211 = vmatprep.mubr.f32.mxu0 0.0
      %2212 = vmatmul.mubr.f32.gmra.mxu0 %v2145
      %v2213 = vpop.f32.mrf.mxu0
      %v2214 = vadd.f32 %v2142, %v2213
      %v2215 = vpop.f32.mrf.mxu0
      %2216 = vdwg.mxu0
      %v2217 = vadd.f32 %v2214, %v2013
      %s2218 = scalar_lea.vmem %s14, 1
      %v2219 = vld [vmem:[%s2218] sm:$0x1]
      %s2220 = scalar_lea.vmem %s15, 1
      %v2221 = vld [vmem:[%s2220] sm:$0x1]
      %v2222 = vsel %vm535, %v2217, 0.0
      %2223 = vadd.xlane.f32.xlu0 %v2222
      %v2224 = vpop.xlane.xlu0 %2223
      %v2225 = vmul.f32 %v2224, %v539
      %v2226 = vsub.f32 %v2217, %v2225
      %v2227 = vmul.f32 %v2226, %v2226
      %v2228 = vsel %vm535, %v2227, 0.0
      %2229 = vadd.xlane.f32.xlu0 %v2228
      %v2230 = vpop.xlane.xlu0 %2229
      %v2231 = vmul.f32 %v2230, %v539
      %v2232 = vadd.f32 %v2231, 1e-12
      %v2233 = vrsqrt.pop %v2232
      %v2234 = vmul.f32 %v2226, %v2233
      %v2236 = vlaneseq
      %v2237 = vshrl.u32 %v2236, 7
      %v2238 = vsub.s32 0, %v2237
      %v2239 = vrot.slane %v2219, %v2238
      %v2241 = vmul.f32 %v2234, %v2239
      %v2243 = vlaneseq
      %v2244 = vshrl.u32 %v2243, 7
      %v2245 = vsub.s32 0, %v2244
      %v2246 = vrot.slane %v2221, %v2245
      %v2248 = vadd.f32 %v2241, %v2246
      %2249 = vst.msk [vmem:[%s530] sm:$0xff] %vm535, %v2248
      %p2250 = scmp.lt.s32.totalorder %s27, 1
      %s2251 = scalar_select %p2250, %s27, 1
      %s2252 = smul.addr %s2251, 8
      %s2253 = scalar_lea.vmem %s16, %s2252
      // Predicated region
      $region85: #{forward_both.1} parent=83 // pred_check
        %p2254 = pneg %p391
      $region86: #{forward_both.1} parent=83 // pred_check_branch
        %2256 = sbr.rel (%p2254) target = $region88
      $region87: #{forward_both.1} parent=83 // pred_region
        _
      $region88: #{forward_both.1} parent=83 // pred_fallthru
        _
    $region84: #{forward_both.1} parent=5 // pred_fallthru
      _
    %p2257 = scmp.le.s32.totalorder 2, %s22
    // Predicated region
    $region89: #{forward_both.1} parent=5 // pred_check
      %p2258 = pneg %p2257
    $region90: #{forward_both.1} parent=5 // pred_check_branch
      %2260 = sbr.rel (%p2258) target = $region92
    $region91: #{forward_both.1} parent=5 // pred_region
      %s2261 = ssub.s32 %s22, 2
      // Predicated region
      $region93: #{forward_both.1} parent=91 // pred_check
        %p2262 = pneg %p397
      $region94: #{forward_both.1} parent=91 // pred_check_branch
        %2264 = sbr.rel (%p2262) target = $region96
      $region95: #{forward_both.1} parent=91 // pred_region
        %p2265 = scmp.lt.s32.totalorder %s28, 1
        %s2266 = scalar_select %p2265, %s28, 1
        %s2267 = smul.addr %s2266, 8
        %s2268 = scalar_lea.vmem %s16, %s2267
      $region96: #{forward_both.1} parent=91 // pred_fallthru
        _
    $region92: #{forward_both.1} parent=5 // pred_fallthru
      _
  $region6: #{forward_both.1} parent=0 // loop_footer
    %s26 = sadd.s32 1, %s22
  $region7: #{forward_both.1} parent=0 // loop_footer_branch
    %21 = sbr.rel target = $region3
  $region8: #{forward_both.1} parent=0 // loop_exit
    _

</llo_original>
